<compile_context>
chip_gen: v7x
topology: tpu7x:2x2x1
jax: 0.10.0
libtpu: 0.0.40
codegen_flags: <defaults>
</compile_context>

<pallas_src>
import functools

import jax
import jax.numpy as jnp
import numpy as np
from jax.experimental import pallas as pl
from jax.experimental.pallas import tpu as pltpu


def _round_up(x, m):
    return ((x + m - 1) // m) * m


_TM_MAX = 256          # M tile (rows of the im2col / batch matrix)
_TK_MAX = 512          # K tile (contraction); single step if K <= 1024
_VMEM_LIMIT = 32 * 1024 * 1024   # explicit scoped-VMEM budget (safe on v7x)


def _pick_tiles(M, K):
    tm = min(_TM_MAX, _round_up(M, 8))
    k_aligned = _round_up(K, 128)
    tk = k_aligned if k_aligned <= 2 * _TK_MAX else _TK_MAX
    m_pad = _round_up(M, tm)
    k_pad = _round_up(k_aligned, tk)
    return tm, tk, m_pad, k_pad


def _pad2d(a, rows, cols):
    r, c = a.shape
    if r == rows and c == cols:
        return a
    return jnp.pad(a, ((0, rows - r), (0, cols - c)))


# ----------------------------------------------------------------------------
# Kernel 1: tiled matmul + bias (+ ReLU).  grid = (M tiles, K tiles).
# ----------------------------------------------------------------------------
def _mm_bias_act_kernel(x_ref, w_ref, b_ref, o_ref, acc_ref, *, apply_relu):
    k = pl.program_id(1)

    @pl.when(k == 0)
    def _():
        acc_ref[...] = jnp.zeros_like(acc_ref)

    acc_ref[...] += jnp.dot(x_ref[...], w_ref[...],
                            preferred_element_type=jnp.float32)

    @pl.when(k == pl.num_programs(1) - 1)
    def _():
        out = acc_ref[...] + b_ref[...]          # (1, N) bias broadcast, epilogue only
        if apply_relu:
            out = jnp.maximum(out, 0.0)
        o_ref[...] = out.astype(o_ref.dtype)


def matmul_bias_act(x, w, b, *, apply_relu, out_dtype):
    """x: (M, K) bf16, w: (K, N) bf16, b: (N,) f32 -> (M, N) out_dtype."""
    M, K = x.shape
    K2, N = w.shape
    assert K == K2, (K, K2)

    tm, tk, m_pad, k_pad = _pick_tiles(M, K)
    x_p = _pad2d(x, m_pad, k_pad)
    w_p = _pad2d(w, k_pad, N)
    b2 = b.reshape(1, N).astype(jnp.float32)

    grid = (m_pad // tm, k_pad // tk)
    kernel = functools.partial(_mm_bias_act_kernel, apply_relu=apply_relu)
    cost = pl.CostEstimate(
        flops=2 * M * K * N,
        transcendentals=0,
        bytes_accessed=int(x.size * x.dtype.itemsize
                           + w.size * w.dtype.itemsize
                           + M * N * jnp.dtype(out_dtype).itemsize),
    )

    out = pl.pallas_call(
        kernel,
        out_shape=jax.ShapeDtypeStruct((m_pad, N), out_dtype),
        grid_spec=pltpu.PrefetchScalarGridSpec(
            num_scalar_prefetch=0,
            grid=grid,
            in_specs=[
                pl.BlockSpec((tm, tk), lambda i, k: (i, k)),
                pl.BlockSpec((tk, N), lambda i, k: (k, 0)),
                pl.BlockSpec((1, N), lambda i, k: (0, 0)),
            ],
            out_specs=pl.BlockSpec((tm, N), lambda i, k: (i, 0)),
            scratch_shapes=[pltpu.VMEM((tm, N), jnp.float32)],
        ),
        compiler_params=pltpu.CompilerParams(
            dimension_semantics=("parallel", "arbitrary"),
            vmem_limit_bytes=_VMEM_LIMIT,
        ),
        cost_estimate=cost,
    )(x_p, w_p, b2)
    return out[:M] if m_pad != M else out


# ----------------------------------------------------------------------------
# Kernel 2: fused fc1 (matmul+bias+ReLU) -> fc2 (matmul+bias) head.
# fc2 weight (512, n_actions) stays VMEM-resident; applied in the epilogue.
# ----------------------------------------------------------------------------
def _fc_head_kernel(x_ref, w1_ref, b1_ref, w2_ref, b2_ref, o_ref, acc_ref):
    k = pl.program_id(1)

    @pl.when(k == 0)
    def _():
        acc_ref[...] = jnp.zeros_like(acc_ref)

    acc_ref[...] += jnp.dot(x_ref[...], w1_ref[...],
                            preferred_element_type=jnp.float32)

    @pl.when(k == pl.num_programs(1) - 1)
    def _():
        hidden = jnp.maximum(acc_ref[...] + b1_ref[...], 0.0)
        actions = jnp.dot(hidden.astype(w2_ref.dtype), w2_ref[...],
                          preferred_element_type=jnp.float32)
        o_ref[...] = (actions + b2_ref[...]).astype(o_ref.dtype)


def fc_head_fused(x, w1, b1, w2, b2):
    """x: (M, K) bf16, w1: (K, H) bf16, w2: (H, A) bf16 -> (M, A) f32."""
    M, K = x.shape
    K2, H = w1.shape
    H2, A = w2.shape
    assert K == K2 and H == H2

    tm, tk, m_pad, k_pad = _pick_tiles(M, K)
    x_p = _pad2d(x, m_pad, k_pad)
    w1_p = _pad2d(w1, k_pad, H)
    b1_2 = b1.reshape(1, H).astype(jnp.float32)
    b2_2 = b2.reshape(1, A).astype(jnp.float32)

    grid = (m_pad // tm, k_pad // tk)
    cost = pl.CostEstimate(
        flops=2 * M * K * H + 2 * M * H * A,
        transcendentals=0,
        bytes_accessed=int(x.size * 2 + w1.size * 2 + w2.size * 2 + M * A * 4),
    )

    out = pl.pallas_call(
        _fc_head_kernel,
        out_shape=jax.ShapeDtypeStruct((m_pad, A), jnp.float32),
        grid_spec=pltpu.PrefetchScalarGridSpec(
            num_scalar_prefetch=0,
            grid=grid,
            in_specs=[
                pl.BlockSpec((tm, tk), lambda i, k: (i, k)),
                pl.BlockSpec((tk, H), lambda i, k: (k, 0)),
                pl.BlockSpec((1, H), lambda i, k: (0, 0)),
                pl.BlockSpec((H, A), lambda i, k: (0, 0)),
                pl.BlockSpec((1, A), lambda i, k: (0, 0)),
            ],
            out_specs=pl.BlockSpec((tm, A), lambda i, k: (i, 0)),
            scratch_shapes=[pltpu.VMEM((tm, H), jnp.float32)],
        ),
        compiler_params=pltpu.CompilerParams(
            dimension_semantics=("parallel", "arbitrary"),
            vmem_limit_bytes=_VMEM_LIMIT,
        ),
        cost_estimate=cost,
    )(x_p, w1_p, b1_2, w2, b2_2)
    return out[:M] if m_pad != M else out


# ----------------------------------------------------------------------------
# Conv2d (valid padding, square stride) = im2col (bf16 glue) + Pallas matmul
# ----------------------------------------------------------------------------
def _im2col_nhwc(x, kh, kw, stride):
    """x: (N, H, W, C) -> (N*OH*OW, KH*KW*C) with per-position order (kh,kw,c)."""
    N, H, W, C = x.shape
    OH = (H - kh) // stride + 1
    OW = (W - kw) // stride + 1
    cols = []
    for i in range(kh):
        for j in range(kw):
            cols.append(
                jax.lax.slice(
                    x,
                    (0, i, j, 0),
                    (N, i + stride * (OH - 1) + 1, j + stride * (OW - 1) + 1, C),
                    (1, stride, stride, 1),
                )
            )  # (N, OH, OW, C)
    cols = jnp.stack(cols, axis=3)               # (N, OH, OW, KH*KW, C)
    return cols.reshape(N * OH * OW, kh * kw * C), (N, OH, OW)


def conv2d_relu(x_nhwc, w_mat, b, kh, kw, stride):
    """w_mat already reshaped to (KH*KW*Cin, O) in (kh, kw, c) contraction order."""
    cols, (N, OH, OW) = _im2col_nhwc(x_nhwc, kh, kw, stride)
    out = matmul_bias_act(cols, w_mat, b, apply_relu=True, out_dtype=jnp.bfloat16)
    return out.reshape(N, OH, OW, -1)


# ----------------------------------------------------------------------------
# DeepQNetwork parameters / forward
# ----------------------------------------------------------------------------
def conv_output_hw(input_dims):
    _, H, W = input_dims
    h1, w1 = (H - 8) // 4 + 1, (W - 8) // 4 + 1
    h2, w2 = (h1 - 4) // 2 + 1, (w1 - 4) // 2 + 1
    h3, w3 = h2 - 3 + 1, w2 - 3 + 1
    return h3, w3


def conv_output_dims(input_dims):
    h3, w3 = conv_output_hw(input_dims)
    return 64 * h3 * w3


def init_params(key, input_dims, n_actions):
    """PyTorch-layout params, deterministic init: U(-1/sqrt(fan_in), +)."""
    C, _, _ = input_dims
    fc_in = conv_output_dims(input_dims)
    ks = jax.random.split(key, 10)

    def u(k, shape, fan_in):
        bound = 1.0 / float(np.sqrt(fan_in))
        return jax.random.uniform(k, shape, jnp.float32, -bound, bound)

    return {
        "conv1_w": u(ks[0], (32, C, 8, 8), C * 8 * 8),
        "conv1_b": u(ks[1], (32,), C * 8 * 8),
        "conv2_w": u(ks[2], (64, 32, 4, 4), 32 * 4 * 4),
        "conv2_b": u(ks[3], (64,), 32 * 4 * 4),
        "conv3_w": u(ks[4], (64, 64, 3, 3), 64 * 3 * 3),
        "conv3_b": u(ks[5], (64,), 64 * 3 * 3),
        # fc weights stored as (in, out) = PyTorch weight.T, rows in NCHW order
        "fc1_w": u(ks[6], (fc_in, 512), fc_in),
        "fc1_b": u(ks[7], (512,), fc_in),
        "fc2_w": u(ks[8], (512, n_actions), 512),
        "fc2_b": u(ks[9], (n_actions,), 512),
    }


def prepare_params(params, input_dims):
    """One-time host-side conversion to kernel-ready layout (no runtime cost):
    conv weights -> (kh*kw*cin, out) matmul layout, fc1 rows permuted from
    PyTorch's NCHW flatten order to the kernel's NHWC flatten order, matmul
    operands cast to bf16 (biases stay f32)."""
    h3, w3 = conv_output_hw(input_dims)

    def conv_w(w_oihw):
        O, Cin, KH, KW = w_oihw.shape
        return (jnp.transpose(w_oihw, (2, 3, 1, 0))
                .reshape(KH * KW * Cin, O).astype(jnp.bfloat16))

    fc1_w = params["fc1_w"]                       # rows ordered (c, h, w)
    fc1_w_nhwc = (fc1_w.reshape(64, h3, w3, 512)
                  .transpose(1, 2, 0, 3)          # rows ordered (h, w, c)
                  .reshape(64 * h3 * w3, 512))

    return {
        "conv1_w": conv_w(params["conv1_w"]), "conv1_b": params["conv1_b"],
        "conv2_w": conv_w(params["conv2_w"]), "conv2_b": params["conv2_b"],
        "conv3_w": conv_w(params["conv3_w"]), "conv3_b": params["conv3_b"],
        "fc1_w": fc1_w_nhwc.astype(jnp.bfloat16), "fc1_b": params["fc1_b"],
        "fc2_w": params["fc2_w"].astype(jnp.bfloat16), "fc2_b": params["fc2_b"],
    }


def dqn_forward(state_nchw, kparams):
    # NCHW (PyTorch) -> NHWC (channels on the lane axis), bf16 activations
    x = jnp.transpose(state_nchw, (0, 2, 3, 1)).astype(jnp.bfloat16)
    x = conv2d_relu(x, kparams["conv1_w"], kparams["conv1_b"], 8, 8, 4)
    x = conv2d_relu(x, kparams["conv2_w"], kparams["conv2_b"], 4, 4, 2)
    x = conv2d_relu(x, kparams["conv3_w"], kparams["conv3_b"], 3, 3, 1)
    # NHWC flatten (fc1 weight rows were pre-permuted to match PyTorch's
    # conv3.view(N, -1) NCHW ordering), then fused fc1+fc2 head.
    x = x.reshape(x.shape[0], -1)
    actions = fc_head_fused(x, kparams["fc1_w"], kparams["fc1_b"],
                            kparams["fc2_w"], kparams["fc2_b"])
    return actions
    # TODO(synk): optimizer/MSELoss/checkpoint save-load are training/IO state,
    # not part of the forward pass, and are intentionally not implemented.


if __name__ == "__main__":
    key = jax.random.PRNGKey(0)
    k_params, k_state = jax.random.split(key)

    # Small shapes consistent with the module's conv stack:
    # (36-8)/4+1=8 -> (8-4)/2+1=3 -> 3-3+1=1  => fc_input_dims = 64
    batch = 2
    input_dims = (4, 36, 36)
    n_actions = 6

    params = init_params(k_params, input_dims, n_actions)
    kparams = prepare_params(params, input_dims)
    state = jax.random.normal(k_state, (batch, *input_dims), jnp.float32)

    fwd = jax.jit(dqn_forward)
    actions = jax.block_until_ready(fwd(state, kparams))
    assert actions.shape == (batch, n_actions), actions.shape
    assert actions.dtype == jnp.float32
    assert bool(jnp.all(jnp.isfinite(actions)))
    print("KERNEL_OK")
</pallas_src>

<mosaic_0001>
module attributes {stable_mosaic.version = 11 : i64} {
  func.func @_mm_bias_act_kernel(%arg0: i32, %arg1: i32, %arg2: memref<128x256xbf16, #tpu.memory_space<vmem>>, %arg3: memref<256x32xbf16, #tpu.memory_space<vmem>>, %arg4: memref<1x32xf32, #tpu.memory_space<vmem>>, %arg5: memref<128x32xbf16, #tpu.memory_space<vmem>>, %arg6: memref<128x32xf32, #tpu.memory_space<vmem>>) attributes {dimension_semantics = [#tpu.dimension_semantics<parallel>, #tpu.dimension_semantics<arbitrary>], iteration_bounds = array<i64: 1, 1>, scalar_prefetch = 0 : i64, scratch_operands = 1 : i64, tpu.core_type = #tpu.core_type<tc>, window_params = [{transform_indices = @transform_0, window_bounds = array<i64: 128, 256>}, {transform_indices = @transform_1, window_bounds = array<i64: 256, 32>}, {pipeline_mode = #tpu.pipeline_mode<synchronous>, transform_indices = @transform_2, window_bounds = array<i64: 1, 32>}, {transform_indices = @transform_3, window_bounds = array<i64: 128, 32>}]} {
    %c0_i32 = arith.constant 0 : i32
    %0 = arith.cmpi eq, %arg1, %c0_i32 : i32
    %1 = arith.extui %0 : i1 to i32
    %c0_i32_0 = arith.constant 0 : i32
    %2 = arith.cmpi ne, %1, %c0_i32_0 : i32
    scf.if %2 {
      %cst_10 = arith.constant 0.000000e+00 : f32
      %12 = vector.broadcast %cst_10 : f32 to vector<128x32xf32>
      %c0_11 = arith.constant 0 : index
      %c0_12 = arith.constant 0 : index
      %13 = vector.load %arg6[%c0_11, %c0_12] : memref<128x32xf32, #tpu.memory_space<vmem>>, vector<128x32xf32>
      tpu.vector_store %arg6[%c0_11, %c0_12], %12 {strides = array<i32>} : memref<128x32xf32, #tpu.memory_space<vmem>>, vector<128x32xf32>,
    } else {
    }
    %c0 = arith.constant 0 : index
    %c0_1 = arith.constant 0 : index
    %3 = vector.load %arg6[%c0, %c0_1] : memref<128x32xf32, #tpu.memory_space<vmem>>, vector<128x32xf32>
    %c0_2 = arith.constant 0 : index
    %c0_3 = arith.constant 0 : index
    %4 = vector.load %arg2[%c0_2, %c0_3] : memref<128x256xbf16, #tpu.memory_space<vmem>>, vector<128x256xbf16>
    %c0_4 = arith.constant 0 : index
    %c0_5 = arith.constant 0 : index
    %5 = vector.load %arg3[%c0_4, %c0_5] : memref<256x32xbf16, #tpu.memory_space<vmem>>, vector<256x32xbf16>
    %cst = arith.constant dense<0.000000e+00> : vector<128x32xf32>
    %6 = tpu.matmul %4, %5, %cst {dimension_numbers = #tpu.dot_dimension_numbers<[1], [0], [0], [1], [0, 0, 1, 1], [], []>} : vector<128x256xbf16>, vector<256x32xbf16>, vector<128x32xf32> -> vector<128x32xf32>
    %7 = arith.addf %3, %6 : vector<128x32xf32>
    %c0_6 = arith.constant 0 : index
    %c0_7 = arith.constant 0 : index
    %8 = vector.load %arg6[%c0_6, %c0_7] : memref<128x32xf32, #tpu.memory_space<vmem>>, vector<128x32xf32>
    tpu.vector_store %arg6[%c0_6, %c0_7], %7 {strides = array<i32>} : memref<128x32xf32, #tpu.memory_space<vmem>>, vector<128x32xf32>,
    %c0_i32_8 = arith.constant 0 : i32
    %9 = arith.cmpi eq, %arg1, %c0_i32_8 : i32
    %10 = arith.extui %9 : i1 to i32
    %c0_i32_9 = arith.constant 0 : i32
    %11 = arith.cmpi ne, %10, %c0_i32_9 : i32
    scf.if %11 {
      %c0_10 = arith.constant 0 : index
      %c0_11 = arith.constant 0 : index
      %12 = vector.load %arg6[%c0_10, %c0_11] : memref<128x32xf32, #tpu.memory_space<vmem>>, vector<128x32xf32>
      %c0_12 = arith.constant 0 : index
      %c0_13 = arith.constant 0 : index
      %13 = vector.load %arg4[%c0_12, %c0_13] : memref<1x32xf32, #tpu.memory_space<vmem>>, vector<1x32xf32>
      %14 = vector.broadcast %13 : vector<1x32xf32> to vector<128x32xf32>
      %15 = arith.addf %12, %14 : vector<128x32xf32>
      %cst_14 = arith.constant 0.000000e+00 : f32
      %16 = vector.broadcast %cst_14 : f32 to vector<128x32xf32>
      %17 = arith.maximumf %15, %16 : vector<128x32xf32>
      %18 = arith.truncf %17 : vector<128x32xf32> to vector<128x32xbf16>
      %c0_15 = arith.constant 0 : index
      %c0_16 = arith.constant 0 : index
      %19 = vector.load %arg5[%c0_15, %c0_16] : memref<128x32xbf16, #tpu.memory_space<vmem>>, vector<128x32xbf16>
      tpu.vector_store %arg5[%c0_15, %c0_16], %18 {strides = array<i32>} : memref<128x32xbf16, #tpu.memory_space<vmem>>, vector<128x32xbf16>,
    } else {
    }
    return
  }
  func.func @transform_0(%arg0: i32, %arg1: i32) -> (i32, i32) {
    %c0_i32 = arith.constant 0 : i32
    return %arg0, %arg1 : i32, i32
  }
  func.func @transform_1(%arg0: i32, %arg1: i32) -> (i32, i32) {
    %c0_i32 = arith.constant 0 : i32
    %c0_i32_0 = arith.constant 0 : i32
    return %arg1, %c0_i32 : i32, i32
  }
  func.func @transform_2(%arg0: i32, %arg1: i32) -> (i32, i32) {
    %c0_i32 = arith.constant 0 : i32
    %c0_i32_0 = arith.constant 0 : i32
    %c0_i32_1 = arith.constant 0 : i32
    return %c0_i32, %c0_i32_0 : i32, i32
  }
  func.func @transform_3(%arg0: i32, %arg1: i32) -> (i32, i32) {
    %c0_i32 = arith.constant 0 : i32
    %c0_i32_0 = arith.constant 0 : i32
    return %arg0, %c0_i32 : i32, i32
  }
}

module attributes {stable_mosaic.version = 11 : i64} {
  func.func @_mm_bias_act_kernel(%arg0: i32, %arg1: i32, %arg2: memref<24x512xbf16, #tpu.memory_space<vmem>>, %arg3: memref<512x64xbf16, #tpu.memory_space<vmem>>, %arg4: memref<1x64xf32, #tpu.memory_space<vmem>>, %arg5: memref<24x64xbf16, #tpu.memory_space<vmem>>, %arg6: memref<24x64xf32, #tpu.memory_space<vmem>>) attributes {dimension_semantics = [#tpu.dimension_semantics<parallel>, #tpu.dimension_semantics<arbitrary>], iteration_bounds = array<i64: 1, 1>, scalar_prefetch = 0 : i64, scratch_operands = 1 : i64, tpu.core_type = #tpu.core_type<tc>, window_params = [{transform_indices = @transform_0, window_bounds = array<i64: 24, 512>}, {transform_indices = @transform_1, window_bounds = array<i64: 512, 64>}, {pipeline_mode = #tpu.pipeline_mode<synchronous>, transform_indices = @transform_2, window_bounds = array<i64: 1, 64>}, {transform_indices = @transform_3, window_bounds = array<i64: 24, 64>}]} {
    %c0_i32 = arith.constant 0 : i32
    %0 = arith.cmpi eq, %arg1, %c0_i32 : i32
    %1 = arith.extui %0 : i1 to i32
    %c0_i32_0 = arith.constant 0 : i32
    %2 = arith.cmpi ne, %1, %c0_i32_0 : i32
    scf.if %2 {
      %cst_10 = arith.constant 0.000000e+00 : f32
      %12 = vector.broadcast %cst_10 : f32 to vector<24x64xf32>
      %c0_11 = arith.constant 0 : index
      %c0_12 = arith.constant 0 : index
      %13 = vector.load %arg6[%c0_11, %c0_12] : memref<24x64xf32, #tpu.memory_space<vmem>>, vector<24x64xf32>
      tpu.vector_store %arg6[%c0_11, %c0_12], %12 {strides = array<i32>} : memref<24x64xf32, #tpu.memory_space<vmem>>, vector<24x64xf32>,
    } else {
    }
    %c0 = arith.constant 0 : index
    %c0_1 = arith.constant 0 : index
    %3 = vector.load %arg6[%c0, %c0_1] : memref<24x64xf32, #tpu.memory_space<vmem>>, vector<24x64xf32>
    %c0_2 = arith.constant 0 : index
    %c0_3 = arith.constant 0 : index
    %4 = vector.load %arg2[%c0_2, %c0_3] : memref<24x512xbf16, #tpu.memory_space<vmem>>, vector<24x512xbf16>
    %c0_4 = arith.constant 0 : index
    %c0_5 = arith.constant 0 : index
    %5 = vector.load %arg3[%c0_4, %c0_5] : memref<512x64xbf16, #tpu.memory_space<vmem>>, vector<512x64xbf16>
    %cst = arith.constant dense<0.000000e+00> : vector<24x64xf32>
    %6 = tpu.matmul %4, %5, %cst {dimension_numbers = #tpu.dot_dimension_numbers<[1], [0], [0], [1], [0, 0, 1, 1], [], []>} : vector<24x512xbf16>, vector<512x64xbf16>, vector<24x64xf32> -> vector<24x64xf32>
    %7 = arith.addf %3, %6 : vector<24x64xf32>
    %c0_6 = arith.constant 0 : index
    %c0_7 = arith.constant 0 : index
    %8 = vector.load %arg6[%c0_6, %c0_7] : memref<24x64xf32, #tpu.memory_space<vmem>>, vector<24x64xf32>
    tpu.vector_store %arg6[%c0_6, %c0_7], %7 {strides = array<i32>} : memref<24x64xf32, #tpu.memory_space<vmem>>, vector<24x64xf32>,
    %c0_i32_8 = arith.constant 0 : i32
    %9 = arith.cmpi eq, %arg1, %c0_i32_8 : i32
    %10 = arith.extui %9 : i1 to i32
    %c0_i32_9 = arith.constant 0 : i32
    %11 = arith.cmpi ne, %10, %c0_i32_9 : i32
    scf.if %11 {
      %c0_10 = arith.constant 0 : index
      %c0_11 = arith.constant 0 : index
      %12 = vector.load %arg6[%c0_10, %c0_11] : memref<24x64xf32, #tpu.memory_space<vmem>>, vector<24x64xf32>
      %c0_12 = arith.constant 0 : index
      %c0_13 = arith.constant 0 : index
      %13 = vector.load %arg4[%c0_12, %c0_13] : memref<1x64xf32, #tpu.memory_space<vmem>>, vector<1x64xf32>
      %14 = vector.broadcast %13 : vector<1x64xf32> to vector<24x64xf32>
      %15 = arith.addf %12, %14 : vector<24x64xf32>
      %cst_14 = arith.constant 0.000000e+00 : f32
      %16 = vector.broadcast %cst_14 : f32 to vector<24x64xf32>
      %17 = arith.maximumf %15, %16 : vector<24x64xf32>
      %18 = arith.truncf %17 : vector<24x64xf32> to vector<24x64xbf16>
      %c0_15 = arith.constant 0 : index
      %c0_16 = arith.constant 0 : index
      %19 = vector.load %arg5[%c0_15, %c0_16] : memref<24x64xbf16, #tpu.memory_space<vmem>>, vector<24x64xbf16>
      tpu.vector_store %arg5[%c0_15, %c0_16], %18 {strides = array<i32>} : memref<24x64xbf16, #tpu.memory_space<vmem>>, vector<24x64xbf16>,
    } else {
    }
    return
  }
  func.func @transform_0(%arg0: i32, %arg1: i32) -> (i32, i32) {
    %c0_i32 = arith.constant 0 : i32
    return %arg0, %arg1 : i32, i32
  }
  func.func @transform_1(%arg0: i32, %arg1: i32) -> (i32, i32) {
    %c0_i32 = arith.constant 0 : i32
    %c0_i32_0 = arith.constant 0 : i32
    return %arg1, %c0_i32 : i32, i32
  }
  func.func @transform_2(%arg0: i32, %arg1: i32) -> (i32, i32) {
    %c0_i32 = arith.constant 0 : i32
    %c0_i32_0 = arith.constant 0 : i32
    %c0_i32_1 = arith.constant 0 : i32
    return %c0_i32, %c0_i32_0 : i32, i32
  }
  func.func @transform_3(%arg0: i32, %arg1: i32) -> (i32, i32) {
    %c0_i32 = arith.constant 0 : i32
    %c0_i32_0 = arith.constant 0 : i32
    return %arg0, %c0_i32 : i32, i32
  }
}

module attributes {stable_mosaic.version = 11 : i64} {
  func.func @_mm_bias_act_kernel(%arg0: i32, %arg1: i32, %arg2: memref<8x640xbf16, #tpu.memory_space<vmem>>, %arg3: memref<640x64xbf16, #tpu.memory_space<vmem>>, %arg4: memref<1x64xf32, #tpu.memory_space<vmem>>, %arg5: memref<8x64xbf16, #tpu.memory_space<vmem>>, %arg6: memref<8x64xf32, #tpu.memory_space<vmem>>) attributes {dimension_semantics = [#tpu.dimension_semantics<parallel>, #tpu.dimension_semantics<arbitrary>], iteration_bounds = array<i64: 1, 1>, scalar_prefetch = 0 : i64, scratch_operands = 1 : i64, tpu.core_type = #tpu.core_type<tc>, window_params = [{transform_indices = @transform_0, window_bounds = array<i64: 8, 640>}, {transform_indices = @transform_1, window_bounds = array<i64: 640, 64>}, {pipeline_mode = #tpu.pipeline_mode<synchronous>, transform_indices = @transform_2, window_bounds = array<i64: 1, 64>}, {transform_indices = @transform_3, window_bounds = array<i64: 8, 64>}]} {
    %c0_i32 = arith.constant 0 : i32
    %0 = arith.cmpi eq, %arg1, %c0_i32 : i32
    %1 = arith.extui %0 : i1 to i32
    %c0_i32_0 = arith.constant 0 : i32
    %2 = arith.cmpi ne, %1, %c0_i32_0 : i32
    scf.if %2 {
      %cst_10 = arith.constant 0.000000e+00 : f32
      %12 = vector.broadcast %cst_10 : f32 to vector<8x64xf32>
      %c0_11 = arith.constant 0 : index
      %c0_12 = arith.constant 0 : index
      %13 = vector.load %arg6[%c0_11, %c0_12] : memref<8x64xf32, #tpu.memory_space<vmem>>, vector<8x64xf32>
      tpu.vector_store %arg6[%c0_11, %c0_12], %12 {strides = array<i32>} : memref<8x64xf32, #tpu.memory_space<vmem>>, vector<8x64xf32>,
    } else {
    }
    %c0 = arith.constant 0 : index
    %c0_1 = arith.constant 0 : index
    %3 = vector.load %arg6[%c0, %c0_1] : memref<8x64xf32, #tpu.memory_space<vmem>>, vector<8x64xf32>
    %c0_2 = arith.constant 0 : index
    %c0_3 = arith.constant 0 : index
    %4 = vector.load %arg2[%c0_2, %c0_3] : memref<8x640xbf16, #tpu.memory_space<vmem>>, vector<8x640xbf16>
    %c0_4 = arith.constant 0 : index
    %c0_5 = arith.constant 0 : index
    %5 = vector.load %arg3[%c0_4, %c0_5] : memref<640x64xbf16, #tpu.memory_space<vmem>>, vector<640x64xbf16>
    %cst = arith.constant dense<0.000000e+00> : vector<8x64xf32>
    %6 = tpu.matmul %4, %5, %cst {dimension_numbers = #tpu.dot_dimension_numbers<[1], [0], [0], [1], [0, 0, 1, 1], [], []>} : vector<8x640xbf16>, vector<640x64xbf16>, vector<8x64xf32> -> vector<8x64xf32>
    %7 = arith.addf %3, %6 : vector<8x64xf32>
    %c0_6 = arith.constant 0 : index
    %c0_7 = arith.constant 0 : index
    %8 = vector.load %arg6[%c0_6, %c0_7] : memref<8x64xf32, #tpu.memory_space<vmem>>, vector<8x64xf32>
    tpu.vector_store %arg6[%c0_6, %c0_7], %7 {strides = array<i32>} : memref<8x64xf32, #tpu.memory_space<vmem>>, vector<8x64xf32>,
    %c0_i32_8 = arith.constant 0 : i32
    %9 = arith.cmpi eq, %arg1, %c0_i32_8 : i32
    %10 = arith.extui %9 : i1 to i32
    %c0_i32_9 = arith.constant 0 : i32
    %11 = arith.cmpi ne, %10, %c0_i32_9 : i32
    scf.if %11 {
      %c0_10 = arith.constant 0 : index
      %c0_11 = arith.constant 0 : index
      %12 = vector.load %arg6[%c0_10, %c0_11] : memref<8x64xf32, #tpu.memory_space<vmem>>, vector<8x64xf32>
      %c0_12 = arith.constant 0 : index
      %c0_13 = arith.constant 0 : index
      %13 = vector.load %arg4[%c0_12, %c0_13] : memref<1x64xf32, #tpu.memory_space<vmem>>, vector<1x64xf32>
      %14 = vector.broadcast %13 : vector<1x64xf32> to vector<8x64xf32>
      %15 = arith.addf %12, %14 : vector<8x64xf32>
      %cst_14 = arith.constant 0.000000e+00 : f32
      %16 = vector.broadcast %cst_14 : f32 to vector<8x64xf32>
      %17 = arith.maximumf %15, %16 : vector<8x64xf32>
      %18 = arith.truncf %17 : vector<8x64xf32> to vector<8x64xbf16>
      %c0_15 = arith.constant 0 : index
      %c0_16 = arith.constant 0 : index
      %19 = vector.load %arg5[%c0_15, %c0_16] : memref<8x64xbf16, #tpu.memory_space<vmem>>, vector<8x64xbf16>
      tpu.vector_store %arg5[%c0_15, %c0_16], %18 {strides = array<i32>} : memref<8x64xbf16, #tpu.memory_space<vmem>>, vector<8x64xbf16>,
    } else {
    }
    return
  }
  func.func @transform_0(%arg0: i32, %arg1: i32) -> (i32, i32) {
    %c0_i32 = arith.constant 0 : i32
    return %arg0, %arg1 : i32, i32
  }
  func.func @transform_1(%arg0: i32, %arg1: i32) -> (i32, i32) {
    %c0_i32 = arith.constant 0 : i32
    %c0_i32_0 = arith.constant 0 : i32
    return %arg1, %c0_i32 : i32, i32
  }
  func.func @transform_2(%arg0: i32, %arg1: i32) -> (i32, i32) {
    %c0_i32 = arith.constant 0 : i32
    %c0_i32_0 = arith.constant 0 : i32
    %c0_i32_1 = arith.constant 0 : i32
    return %c0_i32, %c0_i32_0 : i32, i32
  }
  func.func @transform_3(%arg0: i32, %arg1: i32) -> (i32, i32) {
    %c0_i32 = arith.constant 0 : i32
    %c0_i32_0 = arith.constant 0 : i32
    return %arg0, %c0_i32 : i32, i32
  }
}

module attributes {stable_mosaic.version = 11 : i64} {
  func.func @_fc_head_kernel(%arg0: i32, %arg1: i32, %arg2: memref<8x128xbf16, #tpu.memory_space<vmem>>, %arg3: memref<128x512xbf16, #tpu.memory_space<vmem>>, %arg4: memref<1x512xf32, #tpu.memory_space<vmem>>, %arg5: memref<512x6xbf16, #tpu.memory_space<vmem>>, %arg6: memref<1x6xf32, #tpu.memory_space<vmem>>, %arg7: memref<8x6xf32, #tpu.memory_space<vmem>>, %arg8: memref<8x512xf32, #tpu.memory_space<vmem>>) attributes {dimension_semantics = [#tpu.dimension_semantics<parallel>, #tpu.dimension_semantics<arbitrary>], iteration_bounds = array<i64: 1, 1>, scalar_prefetch = 0 : i64, scratch_operands = 1 : i64, tpu.core_type = #tpu.core_type<tc>, window_params = [{transform_indices = @transform_0, window_bounds = array<i64: 8, 128>}, {transform_indices = @transform_1, window_bounds = array<i64: 128, 512>}, {pipeline_mode = #tpu.pipeline_mode<synchronous>, transform_indices = @transform_2, window_bounds = array<i64: 1, 512>}, {pipeline_mode = #tpu.pipeline_mode<synchronous>, transform_indices = @transform_3, window_bounds = array<i64: 512, 6>}, {pipeline_mode = #tpu.pipeline_mode<synchronous>, transform_indices = @transform_4, window_bounds = array<i64: 1, 6>}, {transform_indices = @transform_5, window_bounds = array<i64: 8, 6>}]} {
    %c0_i32 = arith.constant 0 : i32
    %0 = arith.cmpi eq, %arg1, %c0_i32 : i32
    %1 = arith.extui %0 : i1 to i32
    %c0_i32_0 = arith.constant 0 : i32
    %2 = arith.cmpi ne, %1, %c0_i32_0 : i32
    scf.if %2 {
      %cst_10 = arith.constant 0.000000e+00 : f32
      %12 = vector.broadcast %cst_10 : f32 to vector<8x512xf32>
      %c0_11 = arith.constant 0 : index
      %c0_12 = arith.constant 0 : index
      %13 = vector.load %arg8[%c0_11, %c0_12] : memref<8x512xf32, #tpu.memory_space<vmem>>, vector<8x512xf32>
      tpu.vector_store %arg8[%c0_11, %c0_12], %12 {strides = array<i32>} : memref<8x512xf32, #tpu.memory_space<vmem>>, vector<8x512xf32>,
    } else {
    }
    %c0 = arith.constant 0 : index
    %c0_1 = arith.constant 0 : index
    %3 = vector.load %arg8[%c0, %c0_1] : memref<8x512xf32, #tpu.memory_space<vmem>>, vector<8x512xf32>
    %c0_2 = arith.constant 0 : index
    %c0_3 = arith.constant 0 : index
    %4 = vector.load %arg2[%c0_2, %c0_3] : memref<8x128xbf16, #tpu.memory_space<vmem>>, vector<8x128xbf16>
    %c0_4 = arith.constant 0 : index
    %c0_5 = arith.constant 0 : index
    %5 = vector.load %arg3[%c0_4, %c0_5] : memref<128x512xbf16, #tpu.memory_space<vmem>>, vector<128x512xbf16>
    %cst = arith.constant dense<0.000000e+00> : vector<8x512xf32>
    %6 = tpu.matmul %4, %5, %cst {dimension_numbers = #tpu.dot_dimension_numbers<[1], [0], [0], [1], [0, 0, 1, 1], [], []>} : vector<8x128xbf16>, vector<128x512xbf16>, vector<8x512xf32> -> vector<8x512xf32>
    %7 = arith.addf %3, %6 : vector<8x512xf32>
    %c0_6 = arith.constant 0 : index
    %c0_7 = arith.constant 0 : index
    %8 = vector.load %arg8[%c0_6, %c0_7] : memref<8x512xf32, #tpu.memory_space<vmem>>, vector<8x512xf32>
    tpu.vector_store %arg8[%c0_6, %c0_7], %7 {strides = array<i32>} : memref<8x512xf32, #tpu.memory_space<vmem>>, vector<8x512xf32>,
    %c0_i32_8 = arith.constant 0 : i32
    %9 = arith.cmpi eq, %arg1, %c0_i32_8 : i32
    %10 = arith.extui %9 : i1 to i32
    %c0_i32_9 = arith.constant 0 : i32
    %11 = arith.cmpi ne, %10, %c0_i32_9 : i32
    scf.if %11 {
      %c0_10 = arith.constant 0 : index
      %c0_11 = arith.constant 0 : index
      %12 = vector.load %arg8[%c0_10, %c0_11] : memref<8x512xf32, #tpu.memory_space<vmem>>, vector<8x512xf32>
      %c0_12 = arith.constant 0 : index
      %c0_13 = arith.constant 0 : index
      %13 = vector.load %arg4[%c0_12, %c0_13] : memref<1x512xf32, #tpu.memory_space<vmem>>, vector<1x512xf32>
      %14 = vector.broadcast %13 : vector<1x512xf32> to vector<8x512xf32>
      %15 = arith.addf %12, %14 : vector<8x512xf32>
      %cst_14 = arith.constant 0.000000e+00 : f32
      %16 = vector.broadcast %cst_14 : f32 to vector<8x512xf32>
      %17 = arith.maximumf %15, %16 : vector<8x512xf32>
      %18 = arith.truncf %17 : vector<8x512xf32> to vector<8x512xbf16>
      %c0_15 = arith.constant 0 : index
      %c0_16 = arith.constant 0 : index
      %19 = vector.load %arg5[%c0_15, %c0_16] : memref<512x6xbf16, #tpu.memory_space<vmem>>, vector<512x6xbf16>
      %cst_17 = arith.constant dense<0.000000e+00> : vector<8x6xf32>
      %20 = tpu.matmul %18, %19, %cst_17 {dimension_numbers = #tpu.dot_dimension_numbers<[1], [0], [0], [1], [0, 0, 1, 1], [], []>} : vector<8x512xbf16>, vector<512x6xbf16>, vector<8x6xf32> -> vector<8x6xf32>
      %c0_18 = arith.constant 0 : index
      %c0_19 = arith.constant 0 : index
      %21 = vector.load %arg6[%c0_18, %c0_19] : memref<1x6xf32, #tpu.memory_space<vmem>>, vector<1x6xf32>
      %22 = vector.broadcast %21 : vector<1x6xf32> to vector<8x6xf32>
      %23 = arith.addf %20, %22 : vector<8x6xf32>
      %c0_20 = arith.constant 0 : index
      %c0_21 = arith.constant 0 : index
      %24 = vector.load %arg7[%c0_20, %c0_21] : memref<8x6xf32, #tpu.memory_space<vmem>>, vector<8x6xf32>
      tpu.vector_store %arg7[%c0_20, %c0_21], %23 {strides = array<i32>} : memref<8x6xf32, #tpu.memory_space<vmem>>, vector<8x6xf32>,
    } else {
    }
    return
  }
  func.func @transform_0(%arg0: i32, %arg1: i32) -> (i32, i32) {
    %c0_i32 = arith.constant 0 : i32
    return %arg0, %arg1 : i32, i32
  }
  func.func @transform_1(%arg0: i32, %arg1: i32) -> (i32, i32) {
    %c0_i32 = arith.constant 0 : i32
    %c0_i32_0 = arith.constant 0 : i32
    return %arg1, %c0_i32 : i32, i32
  }
  func.func @transform_2(%arg0: i32, %arg1: i32) -> (i32, i32) {
    %c0_i32 = arith.constant 0 : i32
    %c0_i32_0 = arith.constant 0 : i32
    %c0_i32_1 = arith.constant 0 : i32
    return %c0_i32, %c0_i32_0 : i32, i32
  }
  func.func @transform_3(%arg0: i32, %arg1: i32) -> (i32, i32) {
    %c0_i32 = arith.constant 0 : i32
    %c0_i32_0 = arith.constant 0 : i32
    %c0_i32_1 = arith.constant 0 : i32
    return %c0_i32, %c0_i32_0 : i32, i32
  }
  func.func @transform_4(%arg0: i32, %arg1: i32) -> (i32, i32) {
    %c0_i32 = arith.constant 0 : i32
    %c0_i32_0 = arith.constant 0 : i32
    %c0_i32_1 = arith.constant 0 : i32
    return %c0_i32, %c0_i32_0 : i32, i32
  }
  func.func @transform_5(%arg0: i32, %arg1: i32) -> (i32, i32) {
    %c0_i32 = arith.constant 0 : i32
    %c0_i32_0 = arith.constant 0 : i32
    return %arg0, %c0_i32 : i32, i32
  }
}

</mosaic_0001>

<llo_original>
// kernel: dqn_forward.4
$region0: #{dqn_forward.4}
  #allocation0 [shape = 'u32[]', space=smem, size = 0x4, offset = 0x4, fixed_abs, tag = 'smem constant byte address 0x4 - core index']
  #allocation1 [shape = 'u32[144,128]{1,0:T(1,128)}', space=vmem, size = 0x12000, scoped, tag = 'internal scratch']
  #allocation2 [shape = 'f32[128,32]{1,0:T(8,128)}', space=vmem, size = 0x10000, scoped, tag = 'scratch operand']
  %s0 = inlined_call_operand.vmem [shape: bf16[128,256], index: 0, kind: input, shape index: {}]
  %s1 = inlined_call_operand.vmem [shape: bf16[256,32], index: 1, kind: input, shape index: {}]
  %s2 = inlined_call_operand.vmem [shape: f32[1,32], index: 2, kind: input, shape index: {}]
  %s3 = inlined_call_operand.vmem [shape: bf16[128,32], index: 3, kind: output, shape index: {}]
  %s4 = sld [smem:[#allocation0]]
  $region30: #{dqn_forward.4} parent=0
    _
  %s6 = ssub.s32 1, %s4
  %s7 = scalar_select 0, %s6, %s4
  // Predicated region
  $region2: #{dqn_forward.4} parent=0 // pred_check
    _
  $region3: #{dqn_forward.4} parent=0 // pred_check_branch
    %9 = sbr.rel (0) target = $region5
  $region4: #{dqn_forward.4} parent=0 // pred_region
    _
  $region5: #{dqn_forward.4} parent=0 // pred_fallthru
    _
  // Predicated region
  $region6: #{dqn_forward.4} parent=0 // pred_check
    _
  $region7: #{dqn_forward.4} parent=0 // pred_check_branch
    %11 = sbr.rel (0) target = $region9
  $region8: #{dqn_forward.4} parent=0 // pred_region
    _
  $region9: #{dqn_forward.4} parent=0 // pred_fallthru
    _
  // Predicated region
  $region10: #{dqn_forward.4} parent=0 // pred_check
    _
  $region11: #{dqn_forward.4} parent=0 // pred_check_branch
    %13 = sbr.rel (0) target = $region13
  $region12: #{dqn_forward.4} parent=0 // pred_region
    _
  $region13: #{dqn_forward.4} parent=0 // pred_fallthru
    _
  %p15 = scmp.eq.s32.totalorder 0, 0
  // Predicated region
  $region14: #{dqn_forward.4} parent=0 // pred_check
    %p16 = pneg %p15
  $region15: #{dqn_forward.4} parent=0 // pred_check_branch
    %18 = sbr.rel (%p16) target = $region17
  $region16: #{dqn_forward.4} parent=0 // pred_region
    %vm19 = vcmask 261120
    %20 = vst.msk [vmem:[#allocation2] sm:$0xff] %vm19, 0.0
    %21 = vst.msk [vmem:[#allocation2 + $0x8] sm:$0xff] %vm19, 0.0
    %22 = vst.msk [vmem:[#allocation2 + $0x10] sm:$0xff] %vm19, 0.0
    %23 = vst.msk [vmem:[#allocation2 + $0x18] sm:$0xff] %vm19, 0.0
    %24 = vst.msk [vmem:[#allocation2 + $0x20] sm:$0xff] %vm19, 0.0
    %25 = vst.msk [vmem:[#allocation2 + $0x28] sm:$0xff] %vm19, 0.0
    %26 = vst.msk [vmem:[#allocation2 + $0x30] sm:$0xff] %vm19, 0.0
    %27 = vst.msk [vmem:[#allocation2 + $0x38] sm:$0xff] %vm19, 0.0
    %28 = vst.msk [vmem:[#allocation2 + $0x40] sm:$0xff] %vm19, 0.0
    %29 = vst.msk [vmem:[#allocation2 + $0x48] sm:$0xff] %vm19, 0.0
    %30 = vst.msk [vmem:[#allocation2 + $0x50] sm:$0xff] %vm19, 0.0
    %31 = vst.msk [vmem:[#allocation2 + $0x58] sm:$0xff] %vm19, 0.0
    %32 = vst.msk [vmem:[#allocation2 + $0x60] sm:$0xff] %vm19, 0.0
    %33 = vst.msk [vmem:[#allocation2 + $0x68] sm:$0xff] %vm19, 0.0
    %34 = vst.msk [vmem:[#allocation2 + $0x70] sm:$0xff] %vm19, 0.0
    %35 = vst.msk [vmem:[#allocation2 + $0x78] sm:$0xff] %vm19, 0.0
  $region17: #{dqn_forward.4} parent=0 // pred_fallthru
    _
  %v36 = vld [vmem:[#allocation2] sm:$0xff]
  %v37 = vld [vmem:[#allocation2 + $0x8] sm:$0xff]
  %v38 = vld [vmem:[#allocation2 + $0x10] sm:$0xff]
  %v39 = vld [vmem:[#allocation2 + $0x18] sm:$0xff]
  %v40 = vld [vmem:[#allocation2 + $0x20] sm:$0xff]
  %v41 = vld [vmem:[#allocation2 + $0x28] sm:$0xff]
  %v42 = vld [vmem:[#allocation2 + $0x30] sm:$0xff]
  %v43 = vld [vmem:[#allocation2 + $0x38] sm:$0xff]
  %v44 = vld [vmem:[#allocation2 + $0x40] sm:$0xff]
  %v45 = vld [vmem:[#allocation2 + $0x48] sm:$0xff]
  %v46 = vld [vmem:[#allocation2 + $0x50] sm:$0xff]
  %v47 = vld [vmem:[#allocation2 + $0x58] sm:$0xff]
  %v48 = vld [vmem:[#allocation2 + $0x60] sm:$0xff]
  %v49 = vld [vmem:[#allocation2 + $0x68] sm:$0xff]
  %v50 = vld [vmem:[#allocation2 + $0x70] sm:$0xff]
  %v51 = vld [vmem:[#allocation2 + $0x78] sm:$0xff]
  %v52 = vld [vmem:[%s0] sm:$0xff]
  %v53 = vld [vmem:[%s0 + $0x8] sm:$0xff]
  %v54 = vld [vmem:[%s0 + $0x10] sm:$0xff]
  %v55 = vld [vmem:[%s0 + $0x18] sm:$0xff]
  %v56 = vld [vmem:[%s0 + $0x20] sm:$0xff]
  %v57 = vld [vmem:[%s0 + $0x28] sm:$0xff]
  %v58 = vld [vmem:[%s0 + $0x30] sm:$0xff]
  %v59 = vld [vmem:[%s0 + $0x38] sm:$0xff]
  %v60 = vld [vmem:[%s0 + $0x40] sm:$0xff]
  %v61 = vld [vmem:[%s0 + $0x48] sm:$0xff]
  %v62 = vld [vmem:[%s0 + $0x50] sm:$0xff]
  %v63 = vld [vmem:[%s0 + $0x58] sm:$0xff]
  %v64 = vld [vmem:[%s0 + $0x60] sm:$0xff]
  %v65 = vld [vmem:[%s0 + $0x68] sm:$0xff]
  %v66 = vld [vmem:[%s0 + $0x70] sm:$0xff]
  %v67 = vld [vmem:[%s0 + $0x78] sm:$0xff]
  %v68 = vld [vmem:[%s1] sm:$0xf]
  %v69 = vld [vmem:[%s1 + $0x4] sm:$0xf]
  %v70 = vld [vmem:[%s1 + $0x8] sm:$0xf]
  %v71 = vld [vmem:[%s1 + $0xc] sm:$0xf]
  %v72 = vld [vmem:[%s1 + $0x10] sm:$0xf]
  %v73 = vld [vmem:[%s1 + $0x14] sm:$0xf]
  %v74 = vld [vmem:[%s1 + $0x18] sm:$0xf]
  %v75 = vld [vmem:[%s1 + $0x1c] sm:$0xf]
  %v76 = vld [vmem:[%s1 + $0x20] sm:$0xf]
  %v77 = vld [vmem:[%s1 + $0x24] sm:$0xf]
  %v78 = vld [vmem:[%s1 + $0x28] sm:$0xf]
  %v79 = vld [vmem:[%s1 + $0x2c] sm:$0xf]
  %v80 = vld [vmem:[%s1 + $0x30] sm:$0xf]
  %v81 = vld [vmem:[%s1 + $0x34] sm:$0xf]
  %v82 = vld [vmem:[%s1 + $0x38] sm:$0xf]
  %v83 = vld [vmem:[%s1 + $0x3c] sm:$0xf]
  %v84 = vld [vmem:[%s1 + $0x40] sm:$0xf]
  %v85 = vld [vmem:[%s1 + $0x44] sm:$0xf]
  %v86 = vld [vmem:[%s1 + $0x48] sm:$0xf]
  %v87 = vld [vmem:[%s1 + $0x4c] sm:$0xf]
  %v88 = vld [vmem:[%s1 + $0x50] sm:$0xf]
  %v89 = vld [vmem:[%s1 + $0x54] sm:$0xf]
  %v90 = vld [vmem:[%s1 + $0x58] sm:$0xf]
  %v91 = vld [vmem:[%s1 + $0x5c] sm:$0xf]
  %v92 = vld [vmem:[%s1 + $0x60] sm:$0xf]
  %v93 = vld [vmem:[%s1 + $0x64] sm:$0xf]
  %v94 = vld [vmem:[%s1 + $0x68] sm:$0xf]
  %v95 = vld [vmem:[%s1 + $0x6c] sm:$0xf]
  %v96 = vld [vmem:[%s1 + $0x70] sm:$0xf]
  %v97 = vld [vmem:[%s1 + $0x74] sm:$0xf]
  %v98 = vld [vmem:[%s1 + $0x78] sm:$0xf]
  %v99 = vld [vmem:[%s1 + $0x7c] sm:$0xf]
  %v116 = vunpack.c.l.b16 %v52
  %v117 = vunpack.c.h.b16 %v52
  %v118 = vunpack.c.l.b16 %v53
  %v119 = vunpack.c.h.b16 %v53
  %v120 = vunpack.c.l.b16 %v54
  %v121 = vunpack.c.h.b16 %v54
  %v122 = vunpack.c.l.b16 %v55
  %v123 = vunpack.c.h.b16 %v55
  %v124 = vunpack.c.l.b16 %v56
  %v125 = vunpack.c.h.b16 %v56
  %v126 = vunpack.c.l.b16 %v57
  %v127 = vunpack.c.h.b16 %v57
  %v128 = vunpack.c.l.b16 %v58
  %v129 = vunpack.c.h.b16 %v58
  %v130 = vunpack.c.l.b16 %v59
  %v131 = vunpack.c.h.b16 %v59
  %v132 = vunpack.c.l.b16 %v60
  %v133 = vunpack.c.h.b16 %v60
  %v134 = vunpack.c.l.b16 %v61
  %v135 = vunpack.c.h.b16 %v61
  %v136 = vunpack.c.l.b16 %v62
  %v137 = vunpack.c.h.b16 %v62
  %v138 = vunpack.c.l.b16 %v63
  %v139 = vunpack.c.h.b16 %v63
  %v140 = vunpack.c.l.b16 %v64
  %v141 = vunpack.c.h.b16 %v64
  %v142 = vunpack.c.l.b16 %v65
  %v143 = vunpack.c.h.b16 %v65
  %v144 = vunpack.c.l.b16 %v66
  %v145 = vunpack.c.h.b16 %v66
  %v146 = vunpack.c.l.b16 %v67
  %v147 = vunpack.c.h.b16 %v67
  %v148 = vpack.c.b16 %v118, %v116
  %v149 = vpack.c.b16 %v119, %v117
  %v150 = vpack.c.b16 %v122, %v120
  %v151 = vpack.c.b16 %v123, %v121
  %v152 = vpack.c.b16 %v126, %v124
  %v153 = vpack.c.b16 %v127, %v125
  %v154 = vpack.c.b16 %v130, %v128
  %v155 = vpack.c.b16 %v131, %v129
  %v156 = vpack.c.b16 %v134, %v132
  %v157 = vpack.c.b16 %v135, %v133
  %v158 = vpack.c.b16 %v138, %v136
  %v159 = vpack.c.b16 %v139, %v137
  %v160 = vpack.c.b16 %v142, %v140
  %v161 = vpack.c.b16 %v143, %v141
  %v162 = vpack.c.b16 %v146, %v144
  %v163 = vpack.c.b16 %v147, %v145
  %v212 = vunpack.c.l.b16 %v68
  %v213 = vunpack.c.l.b16 %v69
  %v214 = vunpack.c.l.b16 %v70
  %v215 = vunpack.c.l.b16 %v71
  %v216 = vunpack.c.l.b16 %v72
  %v217 = vunpack.c.l.b16 %v73
  %v218 = vunpack.c.l.b16 %v74
  %v219 = vunpack.c.l.b16 %v75
  %v220 = vunpack.c.l.b16 %v76
  %v221 = vunpack.c.l.b16 %v77
  %v222 = vunpack.c.l.b16 %v78
  %v223 = vunpack.c.l.b16 %v79
  %v224 = vunpack.c.l.b16 %v80
  %v225 = vunpack.c.l.b16 %v81
  %v226 = vunpack.c.l.b16 %v82
  %v227 = vunpack.c.l.b16 %v83
  %v228 = vunpack.c.l.b16 %v84
  %v229 = vunpack.c.l.b16 %v85
  %v230 = vunpack.c.l.b16 %v86
  %v231 = vunpack.c.l.b16 %v87
  %v232 = vunpack.c.l.b16 %v88
  %v233 = vunpack.c.l.b16 %v89
  %v234 = vunpack.c.l.b16 %v90
  %v235 = vunpack.c.l.b16 %v91
  %v236 = vunpack.c.l.b16 %v92
  %v237 = vunpack.c.l.b16 %v93
  %v238 = vunpack.c.l.b16 %v94
  %v239 = vunpack.c.l.b16 %v95
  %v240 = vunpack.c.l.b16 %v96
  %v241 = vunpack.c.l.b16 %v97
  %v242 = vunpack.c.l.b16 %v98
  %v243 = vunpack.c.l.b16 %v99
  %v244 = vpack.c.b16 %v213, %v212
  %v245 = vpack.c.b16 %v215, %v214
  %v246 = vpack.c.b16 %v217, %v216
  %v247 = vpack.c.b16 %v219, %v218
  %v248 = vpack.c.b16 %v221, %v220
  %v249 = vpack.c.b16 %v223, %v222
  %v250 = vpack.c.b16 %v225, %v224
  %v251 = vpack.c.b16 %v227, %v226
  %v252 = vpack.c.b16 %v229, %v228
  %v253 = vpack.c.b16 %v231, %v230
  %v254 = vpack.c.b16 %v233, %v232
  %v255 = vpack.c.b16 %v235, %v234
  %v256 = vpack.c.b16 %v237, %v236
  %v257 = vpack.c.b16 %v239, %v238
  %v258 = vpack.c.b16 %v241, %v240
  %v259 = vpack.c.b16 %v243, %v242
  %276 = vmatprep.subr.bf16.mxu0 0
  %277 = vmatpush1.bf16.msra.mxu0 %v244
  %278 = vmatprep.subr.bf16.mxu0 0
  %279 = vmatpush1.bf16.msra.mxu0 %v245
  %280 = vmatprep.subr.bf16.mxu0 0
  %281 = vmatpush1.bf16.msra.mxu0 %v246
  %282 = vmatprep.subr.bf16.mxu0 0
  %283 = vmatpush1.bf16.msra.mxu0 %v247
  %284 = vmatprep.subr.bf16.mxu0 0
  %285 = vmatpush1.bf16.msra.mxu0 %v248
  %286 = vmatprep.subr.bf16.mxu0 0
  %287 = vmatpush1.bf16.msra.mxu0 %v249
  %288 = vmatprep.subr.bf16.mxu0 0
  %289 = vmatpush1.bf16.msra.mxu0 %v250
  %290 = vmatprep.subr.bf16.mxu0 0
  %291 = vmatpush1.bf16.msra.mxu0 %v251
  %292 = vmatprep.subr.bf16.mxu0 0
  %293 = vmatpush1.bf16.msra.mxu0 %v252
  %294 = vmatprep.subr.bf16.mxu0 0
  %295 = vmatpush1.bf16.msra.mxu0 %v253
  %296 = vmatprep.subr.bf16.mxu0 0
  %297 = vmatpush1.bf16.msra.mxu0 %v254
  %298 = vmatprep.subr.bf16.mxu0 0
  %299 = vmatpush1.bf16.msra.mxu0 %v255
  %300 = vmatprep.subr.bf16.mxu0 0
  %301 = vmatpush1.bf16.msra.mxu0 %v256
  %302 = vmatprep.subr.bf16.mxu0 0
  %303 = vmatpush1.bf16.msra.mxu0 %v257
  %304 = vmatprep.subr.bf16.mxu0 0
  %305 = vmatpush1.bf16.msra.mxu0 %v258
  %306 = vmatprep.subr.bf16.mxu0 0
  %307 = vmatpush1.bf16.msra.mxu0 %v259
  %308 = vmatprep.mubr.bf16.mxu0 %v149
  %309 = vmatmul.mubr.bf16.gmra.mrb[0].mxu0 %v148
  %v310 = vpop.f32.mrb[0].mxu0
  %v311 = vadd.f32 0.0, %v310
  %v312 = vpop.f32.mrb[0].mxu0
  %v313 = vpop.f32.mrb[0].mxu0
  %v314 = vadd.f32 0.0, %v313
  %v315 = vpop.f32.mrb[0].mxu0
  %316 = vmatprep.mubr.bf16.mxu0 %v151
  %317 = vmatmul.mubr.bf16.gmra.mrb[0].mxu0 %v150
  %v318 = vpop.f32.mrb[0].mxu0
  %v319 = vadd.f32 0.0, %v318
  %v320 = vpop.f32.mrb[0].mxu0
  %v321 = vpop.f32.mrb[0].mxu0
  %v322 = vadd.f32 0.0, %v321
  %v323 = vpop.f32.mrb[0].mxu0
  %324 = vmatprep.mubr.bf16.mxu0 %v153
  %325 = vmatmul.mubr.bf16.gmra.mrb[0].mxu0 %v152
  %v326 = vpop.f32.mrb[0].mxu0
  %v327 = vadd.f32 0.0, %v326
  %v328 = vpop.f32.mrb[0].mxu0
  %v329 = vpop.f32.mrb[0].mxu0
  %v330 = vadd.f32 0.0, %v329
  %v331 = vpop.f32.mrb[0].mxu0
  %332 = vmatprep.mubr.bf16.mxu0 %v155
  %333 = vmatmul.mubr.bf16.gmra.mrb[0].mxu0 %v154
  %v334 = vpop.f32.mrb[0].mxu0
  %v335 = vadd.f32 0.0, %v334
  %v336 = vpop.f32.mrb[0].mxu0
  %v337 = vpop.f32.mrb[0].mxu0
  %v338 = vadd.f32 0.0, %v337
  %v339 = vpop.f32.mrb[0].mxu0
  %340 = vmatprep.mubr.bf16.mxu0 %v157
  %341 = vmatmul.mubr.bf16.gmra.mrb[0].mxu0 %v156
  %v342 = vpop.f32.mrb[0].mxu0
  %v343 = vadd.f32 0.0, %v342
  %v344 = vpop.f32.mrb[0].mxu0
  %v345 = vpop.f32.mrb[0].mxu0
  %v346 = vadd.f32 0.0, %v345
  %v347 = vpop.f32.mrb[0].mxu0
  %348 = vmatprep.mubr.bf16.mxu0 %v159
  %349 = vmatmul.mubr.bf16.gmra.mrb[0].mxu0 %v158
  %v350 = vpop.f32.mrb[0].mxu0
  %v351 = vadd.f32 0.0, %v350
  %v352 = vpop.f32.mrb[0].mxu0
  %v353 = vpop.f32.mrb[0].mxu0
  %v354 = vadd.f32 0.0, %v353
  %v355 = vpop.f32.mrb[0].mxu0
  %356 = vmatprep.mubr.bf16.mxu0 %v161
  %357 = vmatmul.mubr.bf16.gmra.mrb[0].mxu0 %v160
  %v358 = vpop.f32.mrb[0].mxu0
  %v359 = vadd.f32 0.0, %v358
  %v360 = vpop.f32.mrb[0].mxu0
  %v361 = vpop.f32.mrb[0].mxu0
  %v362 = vadd.f32 0.0, %v361
  %v363 = vpop.f32.mrb[0].mxu0
  %364 = vmatprep.mubr.bf16.mxu0 %v163
  %365 = vmatmul.mubr.bf16.gmra.mrb[0].mxu0 %v162
  %v366 = vpop.f32.mrb[0].mxu0
  %v367 = vadd.f32 0.0, %v366
  %v368 = vpop.f32.mrb[0].mxu0
  %v369 = vpop.f32.mrb[0].mxu0
  %v370 = vadd.f32 0.0, %v369
  %v371 = vpop.f32.mrb[0].mxu0
  %372 = vdwg.mxu0
  %v373 = vadd.f32 %v36, %v311
  %v374 = vadd.f32 %v37, %v314
  %v375 = vadd.f32 %v38, %v319
  %v376 = vadd.f32 %v39, %v322
  %v377 = vadd.f32 %v40, %v327
  %v378 = vadd.f32 %v41, %v330
  %v379 = vadd.f32 %v42, %v335
  %v380 = vadd.f32 %v43, %v338
  %v381 = vadd.f32 %v44, %v343
  %v382 = vadd.f32 %v45, %v346
  %v383 = vadd.f32 %v46, %v351
  %v384 = vadd.f32 %v47, %v354
  %v385 = vadd.f32 %v48, %v359
  %v386 = vadd.f32 %v49, %v362
  %v387 = vadd.f32 %v50, %v367
  %v388 = vadd.f32 %v51, %v370
  %vm389 = vcmask 261120
  %390 = vst.msk [vmem:[#allocation2] sm:$0xff] %vm389, %v373
  %391 = vst.msk [vmem:[#allocation2 + $0x8] sm:$0xff] %vm389, %v374
  %392 = vst.msk [vmem:[#allocation2 + $0x10] sm:$0xff] %vm389, %v375
  %393 = vst.msk [vmem:[#allocation2 + $0x18] sm:$0xff] %vm389, %v376
  %394 = vst.msk [vmem:[#allocation2 + $0x20] sm:$0xff] %vm389, %v377
  %395 = vst.msk [vmem:[#allocation2 + $0x28] sm:$0xff] %vm389, %v378
  %396 = vst.msk [vmem:[#allocation2 + $0x30] sm:$0xff] %vm389, %v379
  %397 = vst.msk [vmem:[#allocation2 + $0x38] sm:$0xff] %vm389, %v380
  %398 = vst.msk [vmem:[#allocation2 + $0x40] sm:$0xff] %vm389, %v381
  %399 = vst.msk [vmem:[#allocation2 + $0x48] sm:$0xff] %vm389, %v382
  %400 = vst.msk [vmem:[#allocation2 + $0x50] sm:$0xff] %vm389, %v383
  %401 = vst.msk [vmem:[#allocation2 + $0x58] sm:$0xff] %vm389, %v384
  %402 = vst.msk [vmem:[#allocation2 + $0x60] sm:$0xff] %vm389, %v385
  %403 = vst.msk [vmem:[#allocation2 + $0x68] sm:$0xff] %vm389, %v386
  %404 = vst.msk [vmem:[#allocation2 + $0x70] sm:$0xff] %vm389, %v387
  %405 = vst.msk [vmem:[#allocation2 + $0x78] sm:$0xff] %vm389, %v388
  // Predicated region
  $region18: #{dqn_forward.4} parent=0 // pred_check
    %p406 = pneg %p15
  $region19: #{dqn_forward.4} parent=0 // pred_check_branch
    %408 = sbr.rel (%p406) target = $region21
  $region20: #{dqn_forward.4} parent=0 // pred_region
    %v409 = vld [vmem:[#allocation2] sm:$0xff]
    %v410 = vld [vmem:[#allocation2 + $0x8] sm:$0xff]
    %v411 = vld [vmem:[#allocation2 + $0x10] sm:$0xff]
    %v412 = vld [vmem:[#allocation2 + $0x18] sm:$0xff]
    %v413 = vld [vmem:[#allocation2 + $0x20] sm:$0xff]
    %v414 = vld [vmem:[#allocation2 + $0x28] sm:$0xff]
    %v415 = vld [vmem:[#allocation2 + $0x30] sm:$0xff]
    %v416 = vld [vmem:[#allocation2 + $0x38] sm:$0xff]
    %v417 = vld [vmem:[#allocation2 + $0x40] sm:$0xff]
    %v418 = vld [vmem:[#allocation2 + $0x48] sm:$0xff]
    %v419 = vld [vmem:[#allocation2 + $0x50] sm:$0xff]
    %v420 = vld [vmem:[#allocation2 + $0x58] sm:$0xff]
    %v421 = vld [vmem:[#allocation2 + $0x60] sm:$0xff]
    %v422 = vld [vmem:[#allocation2 + $0x68] sm:$0xff]
    %v423 = vld [vmem:[#allocation2 + $0x70] sm:$0xff]
    %v424 = vld [vmem:[#allocation2 + $0x78] sm:$0xff]
    %v425 = vld [vmem:[%s2] sm:$0x1]
    %v427 = vlaneseq
    %v428 = vshrl.u32 %v427, 7
    %v429 = vsub.s32 0, %v428
    %v430 = vrot.slane %v425, %v429
    %v432 = vadd.f32 %v409, %v430
    %v433 = vadd.f32 %v410, %v430
    %v434 = vadd.f32 %v411, %v430
    %v435 = vadd.f32 %v412, %v430
    %v436 = vadd.f32 %v413, %v430
    %v437 = vadd.f32 %v414, %v430
    %v438 = vadd.f32 %v415, %v430
    %v439 = vadd.f32 %v416, %v430
    %v440 = vadd.f32 %v417, %v430
    %v441 = vadd.f32 %v418, %v430
    %v442 = vadd.f32 %v419, %v430
    %v443 = vadd.f32 %v420, %v430
    %v444 = vadd.f32 %v421, %v430
    %v445 = vadd.f32 %v422, %v430
    %v446 = vadd.f32 %v423, %v430
    %v447 = vadd.f32 %v424, %v430
    %v448 = vmax.f32 %v432, 0.0
    %v449 = vmax.f32 %v433, 0.0
    %v450 = vmax.f32 %v434, 0.0
    %v451 = vmax.f32 %v435, 0.0
    %v452 = vmax.f32 %v436, 0.0
    %v453 = vmax.f32 %v437, 0.0
    %v454 = vmax.f32 %v438, 0.0
    %v455 = vmax.f32 %v439, 0.0
    %v456 = vmax.f32 %v440, 0.0
    %v457 = vmax.f32 %v441, 0.0
    %v458 = vmax.f32 %v442, 0.0
    %v459 = vmax.f32 %v443, 0.0
    %v460 = vmax.f32 %v444, 0.0
    %v461 = vmax.f32 %v445, 0.0
    %v462 = vmax.f32 %v446, 0.0
    %v463 = vmax.f32 %v447, 0.0
    %v464 = vpack.c.bf16 %v449, %v448
    %v465 = vpack.c.bf16 %v451, %v450
    %v466 = vpack.c.bf16 %v453, %v452
    %v467 = vpack.c.bf16 %v455, %v454
    %v468 = vpack.c.bf16 %v457, %v456
    %v469 = vpack.c.bf16 %v459, %v458
    %v470 = vpack.c.bf16 %v461, %v460
    %v471 = vpack.c.bf16 %v463, %v462
    %v480 = vunpack.c.l.b16 %v464
    %v481 = vunpack.c.h.b16 %v464
    %v482 = vunpack.c.l.b16 %v465
    %v483 = vunpack.c.h.b16 %v465
    %v484 = vunpack.c.l.b16 %v466
    %v485 = vunpack.c.h.b16 %v466
    %v486 = vunpack.c.l.b16 %v467
    %v487 = vunpack.c.h.b16 %v467
    %v488 = vunpack.c.l.b16 %v468
    %v489 = vunpack.c.h.b16 %v468
    %v490 = vunpack.c.l.b16 %v469
    %v491 = vunpack.c.h.b16 %v469
    %v492 = vunpack.c.l.b16 %v470
    %v493 = vunpack.c.h.b16 %v470
    %v494 = vunpack.c.l.b16 %v471
    %v495 = vunpack.c.h.b16 %v471
    %v496 = vpack.c.b16 %v480, %v480
    %v497 = vpack.c.b16 %v481, %v481
    %v498 = vpack.c.b16 %v482, %v482
    %v499 = vpack.c.b16 %v483, %v483
    %v500 = vpack.c.b16 %v484, %v484
    %v501 = vpack.c.b16 %v485, %v485
    %v502 = vpack.c.b16 %v486, %v486
    %v503 = vpack.c.b16 %v487, %v487
    %v504 = vpack.c.b16 %v488, %v488
    %v505 = vpack.c.b16 %v489, %v489
    %v506 = vpack.c.b16 %v490, %v490
    %v507 = vpack.c.b16 %v491, %v491
    %v508 = vpack.c.b16 %v492, %v492
    %v509 = vpack.c.b16 %v493, %v493
    %v510 = vpack.c.b16 %v494, %v494
    %v511 = vpack.c.b16 %v495, %v495
    %vm528 = vcmask 257024
    %529 = vst.msk [vmem:[%s3] sm:$0xf] %vm528, %v496
    %530 = vst.msk [vmem:[%s3 + $0x4] sm:$0xf] %vm528, %v497
    %531 = vst.msk [vmem:[%s3 + $0x8] sm:$0xf] %vm528, %v498
    %532 = vst.msk [vmem:[%s3 + $0xc] sm:$0xf] %vm528, %v499
    %533 = vst.msk [vmem:[%s3 + $0x10] sm:$0xf] %vm528, %v500
    %534 = vst.msk [vmem:[%s3 + $0x14] sm:$0xf] %vm528, %v501
    %535 = vst.msk [vmem:[%s3 + $0x18] sm:$0xf] %vm528, %v502
    %536 = vst.msk [vmem:[%s3 + $0x1c] sm:$0xf] %vm528, %v503
    %537 = vst.msk [vmem:[%s3 + $0x20] sm:$0xf] %vm528, %v504
    %538 = vst.msk [vmem:[%s3 + $0x24] sm:$0xf] %vm528, %v505
    %539 = vst.msk [vmem:[%s3 + $0x28] sm:$0xf] %vm528, %v506
    %540 = vst.msk [vmem:[%s3 + $0x2c] sm:$0xf] %vm528, %v507
    %541 = vst.msk [vmem:[%s3 + $0x30] sm:$0xf] %vm528, %v508
    %542 = vst.msk [vmem:[%s3 + $0x34] sm:$0xf] %vm528, %v509
    %543 = vst.msk [vmem:[%s3 + $0x38] sm:$0xf] %vm528, %v510
    %544 = vst.msk [vmem:[%s3 + $0x3c] sm:$0xf] %vm528, %v511
  $region21: #{dqn_forward.4} parent=0 // pred_fallthru
    _
  // Predicated region
  $region22: #{dqn_forward.4} parent=0 // pred_check
    _
  $region23: #{dqn_forward.4} parent=0 // pred_check_branch
    %546 = sbr.rel (0) target = $region25
  $region24: #{dqn_forward.4} parent=0 // pred_region
    _
  $region25: #{dqn_forward.4} parent=0 // pred_fallthru
    _
  // Predicated region
  $region26: #{dqn_forward.4} parent=0 // pred_check
    _
  $region27: #{dqn_forward.4} parent=0 // pred_check_branch
    %548 = sbr.rel (0) target = $region29
  $region28: #{dqn_forward.4} parent=0 // pred_region
    _
  $region29: #{dqn_forward.4} parent=0 // pred_fallthru
    _

// kernel: dqn_forward.5
$region0: #{dqn_forward.5}
  #allocation0 [shape = 'u32[]', space=smem, size = 0x4, offset = 0x4, fixed_abs, tag = 'smem constant byte address 0x4 - core index']
  #allocation1 [shape = 'u32[144,128]{1,0:T(1,128)}', space=vmem, size = 0x12000, scoped, tag = 'internal scratch']
  #allocation2 [shape = 'f32[24,64]{1,0:T(8,128)}', space=vmem, size = 0x3000, scoped, tag = 'scratch operand']
  %s0 = inlined_call_operand.vmem [shape: bf16[24,512], index: 0, kind: input, shape index: {}]
  %s1 = inlined_call_operand.vmem [shape: bf16[512,64], index: 1, kind: input, shape index: {}]
  %s2 = inlined_call_operand.vmem [shape: f32[1,64], index: 2, kind: input, shape index: {}]
  %s3 = inlined_call_operand.vmem [shape: bf16[24,64], index: 3, kind: output, shape index: {}]
  %s4 = sld [smem:[#allocation0]]
  $region30: #{dqn_forward.5} parent=0
    _
  %s6 = ssub.s32 1, %s4
  %s7 = scalar_select 0, %s6, %s4
  // Predicated region
  $region2: #{dqn_forward.5} parent=0 // pred_check
    _
  $region3: #{dqn_forward.5} parent=0 // pred_check_branch
    %9 = sbr.rel (0) target = $region5
  $region4: #{dqn_forward.5} parent=0 // pred_region
    _
  $region5: #{dqn_forward.5} parent=0 // pred_fallthru
    _
  // Predicated region
  $region6: #{dqn_forward.5} parent=0 // pred_check
    _
  $region7: #{dqn_forward.5} parent=0 // pred_check_branch
    %11 = sbr.rel (0) target = $region9
  $region8: #{dqn_forward.5} parent=0 // pred_region
    _
  $region9: #{dqn_forward.5} parent=0 // pred_fallthru
    _
  // Predicated region
  $region10: #{dqn_forward.5} parent=0 // pred_check
    _
  $region11: #{dqn_forward.5} parent=0 // pred_check_branch
    %13 = sbr.rel (0) target = $region13
  $region12: #{dqn_forward.5} parent=0 // pred_region
    _
  $region13: #{dqn_forward.5} parent=0 // pred_fallthru
    _
  %p15 = scmp.eq.s32.totalorder 0, 0
  // Predicated region
  $region14: #{dqn_forward.5} parent=0 // pred_check
    %p16 = pneg %p15
  $region15: #{dqn_forward.5} parent=0 // pred_check_branch
    %18 = sbr.rel (%p16) target = $region17
  $region16: #{dqn_forward.5} parent=0 // pred_region
    %vm19 = vcmask 523264
    %20 = vst.msk [vmem:[#allocation2] sm:$0xff] %vm19, 0.0
    %21 = vst.msk [vmem:[#allocation2 + $0x8] sm:$0xff] %vm19, 0.0
    %22 = vst.msk [vmem:[#allocation2 + $0x10] sm:$0xff] %vm19, 0.0
  $region17: #{dqn_forward.5} parent=0 // pred_fallthru
    _
  %v23 = vld [vmem:[#allocation2] sm:$0xff]
  %v24 = vld [vmem:[#allocation2 + $0x8] sm:$0xff]
  %v25 = vld [vmem:[#allocation2 + $0x10] sm:$0xff]
  %v26 = vld [vmem:[%s0] sm:$0xff]
  %v27 = vld [vmem:[%s0 + $0x8] sm:$0xff]
  %v28 = vld [vmem:[%s0 + $0x10] sm:$0xff]
  %v29 = vld [vmem:[%s0 + $0x18] sm:$0xff]
  %v30 = vld [vmem:[%s0 + $0x20] sm:$0xff]
  %v31 = vld [vmem:[%s0 + $0x28] sm:$0xff]
  %v32 = vld [vmem:[%s1] sm:$0xf]
  %v33 = vld [vmem:[%s1 + $0x4] sm:$0xf]
  %v34 = vld [vmem:[%s1 + $0x8] sm:$0xf]
  %v35 = vld [vmem:[%s1 + $0xc] sm:$0xf]
  %v36 = vld [vmem:[%s1 + $0x10] sm:$0xf]
  %v37 = vld [vmem:[%s1 + $0x14] sm:$0xf]
  %v38 = vld [vmem:[%s1 + $0x18] sm:$0xf]
  %v39 = vld [vmem:[%s1 + $0x1c] sm:$0xf]
  %v40 = vld [vmem:[%s1 + $0x20] sm:$0xf]
  %v41 = vld [vmem:[%s1 + $0x24] sm:$0xf]
  %v42 = vld [vmem:[%s1 + $0x28] sm:$0xf]
  %v43 = vld [vmem:[%s1 + $0x2c] sm:$0xf]
  %v44 = vld [vmem:[%s1 + $0x30] sm:$0xf]
  %v45 = vld [vmem:[%s1 + $0x34] sm:$0xf]
  %v46 = vld [vmem:[%s1 + $0x38] sm:$0xf]
  %v47 = vld [vmem:[%s1 + $0x3c] sm:$0xf]
  %v48 = vld [vmem:[%s1 + $0x40] sm:$0xf]
  %v49 = vld [vmem:[%s1 + $0x44] sm:$0xf]
  %v50 = vld [vmem:[%s1 + $0x48] sm:$0xf]
  %v51 = vld [vmem:[%s1 + $0x4c] sm:$0xf]
  %v52 = vld [vmem:[%s1 + $0x50] sm:$0xf]
  %v53 = vld [vmem:[%s1 + $0x54] sm:$0xf]
  %v54 = vld [vmem:[%s1 + $0x58] sm:$0xf]
  %v55 = vld [vmem:[%s1 + $0x5c] sm:$0xf]
  %v56 = vld [vmem:[%s1 + $0x60] sm:$0xf]
  %v57 = vld [vmem:[%s1 + $0x64] sm:$0xf]
  %v58 = vld [vmem:[%s1 + $0x68] sm:$0xf]
  %v59 = vld [vmem:[%s1 + $0x6c] sm:$0xf]
  %v60 = vld [vmem:[%s1 + $0x70] sm:$0xf]
  %v61 = vld [vmem:[%s1 + $0x74] sm:$0xf]
  %v62 = vld [vmem:[%s1 + $0x78] sm:$0xf]
  %v63 = vld [vmem:[%s1 + $0x7c] sm:$0xf]
  %v64 = vld [vmem:[%s1 + $0x80] sm:$0xf]
  %v65 = vld [vmem:[%s1 + $0x84] sm:$0xf]
  %v66 = vld [vmem:[%s1 + $0x88] sm:$0xf]
  %v67 = vld [vmem:[%s1 + $0x8c] sm:$0xf]
  %v68 = vld [vmem:[%s1 + $0x90] sm:$0xf]
  %v69 = vld [vmem:[%s1 + $0x94] sm:$0xf]
  %v70 = vld [vmem:[%s1 + $0x98] sm:$0xf]
  %v71 = vld [vmem:[%s1 + $0x9c] sm:$0xf]
  %v72 = vld [vmem:[%s1 + $0xa0] sm:$0xf]
  %v73 = vld [vmem:[%s1 + $0xa4] sm:$0xf]
  %v74 = vld [vmem:[%s1 + $0xa8] sm:$0xf]
  %v75 = vld [vmem:[%s1 + $0xac] sm:$0xf]
  %v76 = vld [vmem:[%s1 + $0xb0] sm:$0xf]
  %v77 = vld [vmem:[%s1 + $0xb4] sm:$0xf]
  %v78 = vld [vmem:[%s1 + $0xb8] sm:$0xf]
  %v79 = vld [vmem:[%s1 + $0xbc] sm:$0xf]
  %v80 = vld [vmem:[%s1 + $0xc0] sm:$0xf]
  %v81 = vld [vmem:[%s1 + $0xc4] sm:$0xf]
  %v82 = vld [vmem:[%s1 + $0xc8] sm:$0xf]
  %v83 = vld [vmem:[%s1 + $0xcc] sm:$0xf]
  %v84 = vld [vmem:[%s1 + $0xd0] sm:$0xf]
  %v85 = vld [vmem:[%s1 + $0xd4] sm:$0xf]
  %v86 = vld [vmem:[%s1 + $0xd8] sm:$0xf]
  %v87 = vld [vmem:[%s1 + $0xdc] sm:$0xf]
  %v88 = vld [vmem:[%s1 + $0xe0] sm:$0xf]
  %v89 = vld [vmem:[%s1 + $0xe4] sm:$0xf]
  %v90 = vld [vmem:[%s1 + $0xe8] sm:$0xf]
  %v91 = vld [vmem:[%s1 + $0xec] sm:$0xf]
  %v92 = vld [vmem:[%s1 + $0xf0] sm:$0xf]
  %v93 = vld [vmem:[%s1 + $0xf4] sm:$0xf]
  %v94 = vld [vmem:[%s1 + $0xf8] sm:$0xf]
  %v95 = vld [vmem:[%s1 + $0xfc] sm:$0xf]
  %v102 = vunpack.c.l.b16 %v26
  %v103 = vunpack.c.h.b16 %v26
  %v104 = vunpack.c.l.b16 %v27
  %v105 = vunpack.c.h.b16 %v27
  %v106 = vunpack.c.l.b16 %v28
  %v107 = vunpack.c.h.b16 %v28
  %v108 = vunpack.c.l.b16 %v29
  %v109 = vunpack.c.h.b16 %v29
  %v110 = vunpack.c.l.b16 %v30
  %v111 = vunpack.c.h.b16 %v30
  %v112 = vunpack.c.l.b16 %v31
  %v113 = vunpack.c.h.b16 %v31
  %v114 = vpack.c.b16 %v106, %v102
  %v115 = vpack.c.b16 %v107, %v103
  %v116 = vpack.c.b16 %v108, %v104
  %v117 = vpack.c.b16 %v109, %v105
  %v118 = vpack.c.b16 %v110, %v110
  %v119 = vpack.c.b16 %v111, %v111
  %v120 = vpack.c.b16 %v112, %v112
  %v121 = vpack.c.b16 %v113, %v113
  %v194 = vunpack.c.l.b16 %v32
  %v195 = vunpack.c.l.b16 %v33
  %v196 = vunpack.c.l.b16 %v34
  %v197 = vunpack.c.l.b16 %v35
  %v198 = vunpack.c.l.b16 %v36
  %v199 = vunpack.c.l.b16 %v37
  %v200 = vunpack.c.l.b16 %v38
  %v201 = vunpack.c.l.b16 %v39
  %v202 = vunpack.c.l.b16 %v40
  %v203 = vunpack.c.l.b16 %v41
  %v204 = vunpack.c.l.b16 %v42
  %v205 = vunpack.c.l.b16 %v43
  %v206 = vunpack.c.l.b16 %v44
  %v207 = vunpack.c.l.b16 %v45
  %v208 = vunpack.c.l.b16 %v46
  %v209 = vunpack.c.l.b16 %v47
  %v210 = vunpack.c.l.b16 %v48
  %v211 = vunpack.c.l.b16 %v49
  %v212 = vunpack.c.l.b16 %v50
  %v213 = vunpack.c.l.b16 %v51
  %v214 = vunpack.c.l.b16 %v52
  %v215 = vunpack.c.l.b16 %v53
  %v216 = vunpack.c.l.b16 %v54
  %v217 = vunpack.c.l.b16 %v55
  %v218 = vunpack.c.l.b16 %v56
  %v219 = vunpack.c.l.b16 %v57
  %v220 = vunpack.c.l.b16 %v58
  %v221 = vunpack.c.l.b16 %v59
  %v222 = vunpack.c.l.b16 %v60
  %v223 = vunpack.c.l.b16 %v61
  %v224 = vunpack.c.l.b16 %v62
  %v225 = vunpack.c.l.b16 %v63
  %v226 = vunpack.c.l.b16 %v64
  %v227 = vunpack.c.l.b16 %v65
  %v228 = vunpack.c.l.b16 %v66
  %v229 = vunpack.c.l.b16 %v67
  %v230 = vunpack.c.l.b16 %v68
  %v231 = vunpack.c.l.b16 %v69
  %v232 = vunpack.c.l.b16 %v70
  %v233 = vunpack.c.l.b16 %v71
  %v234 = vunpack.c.l.b16 %v72
  %v235 = vunpack.c.l.b16 %v73
  %v236 = vunpack.c.l.b16 %v74
  %v237 = vunpack.c.l.b16 %v75
  %v238 = vunpack.c.l.b16 %v76
  %v239 = vunpack.c.l.b16 %v77
  %v240 = vunpack.c.l.b16 %v78
  %v241 = vunpack.c.l.b16 %v79
  %v242 = vunpack.c.l.b16 %v80
  %v243 = vunpack.c.l.b16 %v81
  %v244 = vunpack.c.l.b16 %v82
  %v245 = vunpack.c.l.b16 %v83
  %v246 = vunpack.c.l.b16 %v84
  %v247 = vunpack.c.l.b16 %v85
  %v248 = vunpack.c.l.b16 %v86
  %v249 = vunpack.c.l.b16 %v87
  %v250 = vunpack.c.l.b16 %v88
  %v251 = vunpack.c.l.b16 %v89
  %v252 = vunpack.c.l.b16 %v90
  %v253 = vunpack.c.l.b16 %v91
  %v254 = vunpack.c.l.b16 %v92
  %v255 = vunpack.c.l.b16 %v93
  %v256 = vunpack.c.l.b16 %v94
  %v257 = vunpack.c.l.b16 %v95
  %v258 = vpack.c.b16 %v195, %v194
  %v259 = vpack.c.b16 %v197, %v196
  %v260 = vpack.c.b16 %v199, %v198
  %v261 = vpack.c.b16 %v201, %v200
  %v262 = vpack.c.b16 %v203, %v202
  %v263 = vpack.c.b16 %v205, %v204
  %v264 = vpack.c.b16 %v207, %v206
  %v265 = vpack.c.b16 %v209, %v208
  %v266 = vpack.c.b16 %v211, %v210
  %v267 = vpack.c.b16 %v213, %v212
  %v268 = vpack.c.b16 %v215, %v214
  %v269 = vpack.c.b16 %v217, %v216
  %v270 = vpack.c.b16 %v219, %v218
  %v271 = vpack.c.b16 %v221, %v220
  %v272 = vpack.c.b16 %v223, %v222
  %v273 = vpack.c.b16 %v225, %v224
  %v274 = vpack.c.b16 %v227, %v226
  %v275 = vpack.c.b16 %v229, %v228
  %v276 = vpack.c.b16 %v231, %v230
  %v277 = vpack.c.b16 %v233, %v232
  %v278 = vpack.c.b16 %v235, %v234
  %v279 = vpack.c.b16 %v237, %v236
  %v280 = vpack.c.b16 %v239, %v238
  %v281 = vpack.c.b16 %v241, %v240
  %v282 = vpack.c.b16 %v243, %v242
  %v283 = vpack.c.b16 %v245, %v244
  %v284 = vpack.c.b16 %v247, %v246
  %v285 = vpack.c.b16 %v249, %v248
  %v286 = vpack.c.b16 %v251, %v250
  %v287 = vpack.c.b16 %v253, %v252
  %v288 = vpack.c.b16 %v255, %v254
  %v289 = vpack.c.b16 %v257, %v256
  %322 = vmatprep.subr.bf16.mxu0 0
  %323 = vmatpush1.bf16.msra.mxu0 %v258
  %324 = vmatprep.subr.bf16.mxu0 0
  %325 = vmatpush1.bf16.msra.mxu0 %v259
  %326 = vmatprep.subr.bf16.mxu0 0
  %327 = vmatpush1.bf16.msra.mxu0 %v260
  %328 = vmatprep.subr.bf16.mxu0 0
  %329 = vmatpush1.bf16.msra.mxu0 %v261
  %330 = vmatprep.subr.bf16.mxu0 0
  %331 = vmatpush1.bf16.msra.mxu0 %v262
  %332 = vmatprep.subr.bf16.mxu0 0
  %333 = vmatpush1.bf16.msra.mxu0 %v263
  %334 = vmatprep.subr.bf16.mxu0 0
  %335 = vmatpush1.bf16.msra.mxu0 %v264
  %336 = vmatprep.subr.bf16.mxu0 0
  %337 = vmatpush1.bf16.msra.mxu0 %v265
  %338 = vmatprep.subr.bf16.mxu0 0
  %339 = vmatpush1.bf16.msra.mxu0 %v266
  %340 = vmatprep.subr.bf16.mxu0 0
  %341 = vmatpush1.bf16.msra.mxu0 %v267
  %342 = vmatprep.subr.bf16.mxu0 0
  %343 = vmatpush1.bf16.msra.mxu0 %v268
  %344 = vmatprep.subr.bf16.mxu0 0
  %345 = vmatpush1.bf16.msra.mxu0 %v269
  %346 = vmatprep.subr.bf16.mxu0 0
  %347 = vmatpush1.bf16.msra.mxu0 %v270
  %348 = vmatprep.subr.bf16.mxu0 0
  %349 = vmatpush1.bf16.msra.mxu0 %v271
  %350 = vmatprep.subr.bf16.mxu0 0
  %351 = vmatpush1.bf16.msra.mxu0 %v272
  %352 = vmatprep.subr.bf16.mxu0 0
  %353 = vmatpush1.bf16.msra.mxu0 %v273
  %354 = vmatprep.mubr.bf16.mxu0 %v115
  %355 = vmatmul.mubr.bf16.gmra.mrb[0].mxu0 %v114
  %v356 = vpop.f32.mrb[0].mxu0
  %v357 = vadd.f32 0.0, %v356
  %v358 = vpop.f32.mrb[0].mxu0
  %v359 = vpop.f32.mrb[0].mxu0
  %v360 = vadd.f32 0.0, %v359
  %v361 = vpop.f32.mrb[0].mxu0
  %362 = vmatprep.mubr.bf16.mxu0 %v119
  %363 = vmatmul.mubr.bf16.gmra.mrb[0].mxu0 %v118
  %v364 = vpop.f32.mrb[0].mxu0
  %v365 = vadd.f32 0.0, %v364
  %v366 = vpop.f32.mrb[0].mxu0
  %v367 = vpop.f32.mrb[0].mxu0
  %v368 = vpop.f32.mrb[0].mxu0
  %369 = vdwg.mxu0
  %370 = vmatprep.subr.bf16.mxu0 0
  %371 = vmatpush1.bf16.msra.mxu0 %v274
  %372 = vmatprep.subr.bf16.mxu0 0
  %373 = vmatpush1.bf16.msra.mxu0 %v275
  %374 = vmatprep.subr.bf16.mxu0 0
  %375 = vmatpush1.bf16.msra.mxu0 %v276
  %376 = vmatprep.subr.bf16.mxu0 0
  %377 = vmatpush1.bf16.msra.mxu0 %v277
  %378 = vmatprep.subr.bf16.mxu0 0
  %379 = vmatpush1.bf16.msra.mxu0 %v278
  %380 = vmatprep.subr.bf16.mxu0 0
  %381 = vmatpush1.bf16.msra.mxu0 %v279
  %382 = vmatprep.subr.bf16.mxu0 0
  %383 = vmatpush1.bf16.msra.mxu0 %v280
  %384 = vmatprep.subr.bf16.mxu0 0
  %385 = vmatpush1.bf16.msra.mxu0 %v281
  %386 = vmatprep.subr.bf16.mxu0 0
  %387 = vmatpush1.bf16.msra.mxu0 %v282
  %388 = vmatprep.subr.bf16.mxu0 0
  %389 = vmatpush1.bf16.msra.mxu0 %v283
  %390 = vmatprep.subr.bf16.mxu0 0
  %391 = vmatpush1.bf16.msra.mxu0 %v284
  %392 = vmatprep.subr.bf16.mxu0 0
  %393 = vmatpush1.bf16.msra.mxu0 %v285
  %394 = vmatprep.subr.bf16.mxu0 0
  %395 = vmatpush1.bf16.msra.mxu0 %v286
  %396 = vmatprep.subr.bf16.mxu0 0
  %397 = vmatpush1.bf16.msra.mxu0 %v287
  %398 = vmatprep.subr.bf16.mxu0 0
  %399 = vmatpush1.bf16.msra.mxu0 %v288
  %400 = vmatprep.subr.bf16.mxu0 0
  %401 = vmatpush1.bf16.msra.mxu0 %v289
  %402 = vmatprep.mubr.bf16.mxu0 %v117
  %403 = vmatmul.mubr.bf16.gmra.mrb[0].mxu0 %v116
  %v404 = vpop.f32.mrb[0].mxu0
  %v405 = vadd.f32 %v357, %v404
  %v406 = vpop.f32.mrb[0].mxu0
  %v407 = vpop.f32.mrb[0].mxu0
  %v408 = vadd.f32 %v360, %v407
  %v409 = vpop.f32.mrb[0].mxu0
  %410 = vmatprep.mubr.bf16.mxu0 %v121
  %411 = vmatmul.mubr.bf16.gmra.mrb[0].mxu0 %v120
  %v412 = vpop.f32.mrb[0].mxu0
  %v413 = vadd.f32 %v365, %v412
  %v414 = vpop.f32.mrb[0].mxu0
  %v415 = vpop.f32.mrb[0].mxu0
  %v416 = vpop.f32.mrb[0].mxu0
  %417 = vdwg.mxu0
  %v418 = vadd.f32 %v23, %v405
  %v419 = vadd.f32 %v24, %v408
  %v420 = vadd.f32 %v25, %v413
  %vm421 = vcmask 523264
  %422 = vst.msk [vmem:[#allocation2] sm:$0xff] %vm421, %v418
  %423 = vst.msk [vmem:[#allocation2 + $0x8] sm:$0xff] %vm421, %v419
  %424 = vst.msk [vmem:[#allocation2 + $0x10] sm:$0xff] %vm421, %v420
  // Predicated region
  $region18: #{dqn_forward.5} parent=0 // pred_check
    %p425 = pneg %p15
  $region19: #{dqn_forward.5} parent=0 // pred_check_branch
    %427 = sbr.rel (%p425) target = $region21
  $region20: #{dqn_forward.5} parent=0 // pred_region
    %v428 = vld [vmem:[#allocation2] sm:$0xff]
    %v429 = vld [vmem:[#allocation2 + $0x8] sm:$0xff]
    %v430 = vld [vmem:[#allocation2 + $0x10] sm:$0xff]
    %v431 = vld [vmem:[%s2] sm:$0x1]
    %v433 = vlaneseq
    %v434 = vshrl.u32 %v433, 7
    %v435 = vsub.s32 0, %v434
    %v436 = vrot.slane %v431, %v435
    %v438 = vadd.f32 %v428, %v436
    %v439 = vadd.f32 %v429, %v436
    %v440 = vadd.f32 %v430, %v436
    %v441 = vmax.f32 %v438, 0.0
    %v442 = vmax.f32 %v439, 0.0
    %v443 = vmax.f32 %v440, 0.0
    %v444 = vpack.c.bf16 %v442, %v441
    %v445 = vpack.c.bf16 %v443, %v443
    %v448 = vunpack.c.l.b16 %v444
    %v449 = vunpack.c.h.b16 %v444
    %v450 = vunpack.c.l.b16 %v445
    %v451 = vpack.c.b16 %v448, %v448
    %v452 = vpack.c.b16 %v449, %v449
    %v453 = vpack.c.b16 %v450, %v450
    %vm457 = vcmask 519168
    %458 = vst.msk [vmem:[%s3] sm:$0xf] %vm457, %v451
    %459 = vst.msk [vmem:[%s3 + $0x4] sm:$0xf] %vm457, %v452
    %460 = vst.msk [vmem:[%s3 + $0x8] sm:$0xf] %vm457, %v453
  $region21: #{dqn_forward.5} parent=0 // pred_fallthru
    _
  // Predicated region
  $region22: #{dqn_forward.5} parent=0 // pred_check
    _
  $region23: #{dqn_forward.5} parent=0 // pred_check_branch
    %462 = sbr.rel (0) target = $region25
  $region24: #{dqn_forward.5} parent=0 // pred_region
    _
  $region25: #{dqn_forward.5} parent=0 // pred_fallthru
    _
  // Predicated region
  $region26: #{dqn_forward.5} parent=0 // pred_check
    _
  $region27: #{dqn_forward.5} parent=0 // pred_check_branch
    %464 = sbr.rel (0) target = $region29
  $region28: #{dqn_forward.5} parent=0 // pred_region
    _
  $region29: #{dqn_forward.5} parent=0 // pred_fallthru
    _

// kernel: dqn_forward.6
$region0: #{dqn_forward.6}
  #allocation0 [shape = 'u32[]', space=smem, size = 0x4, offset = 0x4, fixed_abs, tag = 'smem constant byte address 0x4 - core index']
  #allocation1 [shape = 'u32[144,128]{1,0:T(1,128)}', space=vmem, size = 0x12000, scoped, tag = 'internal scratch']
  #allocation2 [shape = 'f32[8,64]{1,0:T(8,128)}', space=vmem, size = 0x1000, scoped, tag = 'scratch operand']
  %s0 = inlined_call_operand.vmem [shape: bf16[8,640], index: 0, kind: input, shape index: {}]
  %s1 = inlined_call_operand.vmem [shape: bf16[640,64], index: 1, kind: input, shape index: {}]
  %s2 = inlined_call_operand.vmem [shape: f32[1,64], index: 2, kind: input, shape index: {}]
  %s3 = inlined_call_operand.vmem [shape: bf16[8,64], index: 3, kind: output, shape index: {}]
  %s4 = sld [smem:[#allocation0]]
  $region30: #{dqn_forward.6} parent=0
    _
  %s6 = ssub.s32 1, %s4
  %s7 = scalar_select 0, %s6, %s4
  // Predicated region
  $region2: #{dqn_forward.6} parent=0 // pred_check
    _
  $region3: #{dqn_forward.6} parent=0 // pred_check_branch
    %9 = sbr.rel (0) target = $region5
  $region4: #{dqn_forward.6} parent=0 // pred_region
    _
  $region5: #{dqn_forward.6} parent=0 // pred_fallthru
    _
  // Predicated region
  $region6: #{dqn_forward.6} parent=0 // pred_check
    _
  $region7: #{dqn_forward.6} parent=0 // pred_check_branch
    %11 = sbr.rel (0) target = $region9
  $region8: #{dqn_forward.6} parent=0 // pred_region
    _
  $region9: #{dqn_forward.6} parent=0 // pred_fallthru
    _
  // Predicated region
  $region10: #{dqn_forward.6} parent=0 // pred_check
    _
  $region11: #{dqn_forward.6} parent=0 // pred_check_branch
    %13 = sbr.rel (0) target = $region13
  $region12: #{dqn_forward.6} parent=0 // pred_region
    _
  $region13: #{dqn_forward.6} parent=0 // pred_fallthru
    _
  %p15 = scmp.eq.s32.totalorder 0, 0
  // Predicated region
  $region14: #{dqn_forward.6} parent=0 // pred_check
    %p16 = pneg %p15
  $region15: #{dqn_forward.6} parent=0 // pred_check_branch
    %18 = sbr.rel (%p16) target = $region17
  $region16: #{dqn_forward.6} parent=0 // pred_region
    %vm19 = vcmask 523264
    %20 = vst.msk [vmem:[#allocation2] sm:$0xff] %vm19, 0.0
  $region17: #{dqn_forward.6} parent=0 // pred_fallthru
    _
  %v21 = vld [vmem:[#allocation2] sm:$0xff]
  %v22 = vld [vmem:[%s0] sm:$0xff]
  %v23 = vld [vmem:[%s0 + $0x8] sm:$0xff]
  %v24 = vld [vmem:[%s0 + $0x10] sm:$0xf]
  %v25 = vld [vmem:[%s1] sm:$0xf]
  %v26 = vld [vmem:[%s1 + $0x4] sm:$0xf]
  %v27 = vld [vmem:[%s1 + $0x8] sm:$0xf]
  %v28 = vld [vmem:[%s1 + $0xc] sm:$0xf]
  %v29 = vld [vmem:[%s1 + $0x10] sm:$0xf]
  %v30 = vld [vmem:[%s1 + $0x14] sm:$0xf]
  %v31 = vld [vmem:[%s1 + $0x18] sm:$0xf]
  %v32 = vld [vmem:[%s1 + $0x1c] sm:$0xf]
  %v33 = vld [vmem:[%s1 + $0x20] sm:$0xf]
  %v34 = vld [vmem:[%s1 + $0x24] sm:$0xf]
  %v35 = vld [vmem:[%s1 + $0x28] sm:$0xf]
  %v36 = vld [vmem:[%s1 + $0x2c] sm:$0xf]
  %v37 = vld [vmem:[%s1 + $0x30] sm:$0xf]
  %v38 = vld [vmem:[%s1 + $0x34] sm:$0xf]
  %v39 = vld [vmem:[%s1 + $0x38] sm:$0xf]
  %v40 = vld [vmem:[%s1 + $0x3c] sm:$0xf]
  %v41 = vld [vmem:[%s1 + $0x40] sm:$0xf]
  %v42 = vld [vmem:[%s1 + $0x44] sm:$0xf]
  %v43 = vld [vmem:[%s1 + $0x48] sm:$0xf]
  %v44 = vld [vmem:[%s1 + $0x4c] sm:$0xf]
  %v45 = vld [vmem:[%s1 + $0x50] sm:$0xf]
  %v46 = vld [vmem:[%s1 + $0x54] sm:$0xf]
  %v47 = vld [vmem:[%s1 + $0x58] sm:$0xf]
  %v48 = vld [vmem:[%s1 + $0x5c] sm:$0xf]
  %v49 = vld [vmem:[%s1 + $0x60] sm:$0xf]
  %v50 = vld [vmem:[%s1 + $0x64] sm:$0xf]
  %v51 = vld [vmem:[%s1 + $0x68] sm:$0xf]
  %v52 = vld [vmem:[%s1 + $0x6c] sm:$0xf]
  %v53 = vld [vmem:[%s1 + $0x70] sm:$0xf]
  %v54 = vld [vmem:[%s1 + $0x74] sm:$0xf]
  %v55 = vld [vmem:[%s1 + $0x78] sm:$0xf]
  %v56 = vld [vmem:[%s1 + $0x7c] sm:$0xf]
  %v57 = vld [vmem:[%s1 + $0x80] sm:$0xf]
  %v58 = vld [vmem:[%s1 + $0x84] sm:$0xf]
  %v59 = vld [vmem:[%s1 + $0x88] sm:$0xf]
  %v60 = vld [vmem:[%s1 + $0x8c] sm:$0xf]
  %v61 = vld [vmem:[%s1 + $0x90] sm:$0xf]
  %v62 = vld [vmem:[%s1 + $0x94] sm:$0xf]
  %v63 = vld [vmem:[%s1 + $0x98] sm:$0xf]
  %v64 = vld [vmem:[%s1 + $0x9c] sm:$0xf]
  %v65 = vld [vmem:[%s1 + $0xa0] sm:$0xf]
  %v66 = vld [vmem:[%s1 + $0xa4] sm:$0xf]
  %v67 = vld [vmem:[%s1 + $0xa8] sm:$0xf]
  %v68 = vld [vmem:[%s1 + $0xac] sm:$0xf]
  %v69 = vld [vmem:[%s1 + $0xb0] sm:$0xf]
  %v70 = vld [vmem:[%s1 + $0xb4] sm:$0xf]
  %v71 = vld [vmem:[%s1 + $0xb8] sm:$0xf]
  %v72 = vld [vmem:[%s1 + $0xbc] sm:$0xf]
  %v73 = vld [vmem:[%s1 + $0xc0] sm:$0xf]
  %v74 = vld [vmem:[%s1 + $0xc4] sm:$0xf]
  %v75 = vld [vmem:[%s1 + $0xc8] sm:$0xf]
  %v76 = vld [vmem:[%s1 + $0xcc] sm:$0xf]
  %v77 = vld [vmem:[%s1 + $0xd0] sm:$0xf]
  %v78 = vld [vmem:[%s1 + $0xd4] sm:$0xf]
  %v79 = vld [vmem:[%s1 + $0xd8] sm:$0xf]
  %v80 = vld [vmem:[%s1 + $0xdc] sm:$0xf]
  %v81 = vld [vmem:[%s1 + $0xe0] sm:$0xf]
  %v82 = vld [vmem:[%s1 + $0xe4] sm:$0xf]
  %v83 = vld [vmem:[%s1 + $0xe8] sm:$0xf]
  %v84 = vld [vmem:[%s1 + $0xec] sm:$0xf]
  %v85 = vld [vmem:[%s1 + $0xf0] sm:$0xf]
  %v86 = vld [vmem:[%s1 + $0xf4] sm:$0xf]
  %v87 = vld [vmem:[%s1 + $0xf8] sm:$0xf]
  %v88 = vld [vmem:[%s1 + $0xfc] sm:$0xf]
  %v89 = vld [vmem:[%s1 + $0x100] sm:$0xf]
  %v90 = vld [vmem:[%s1 + $0x104] sm:$0xf]
  %v91 = vld [vmem:[%s1 + $0x108] sm:$0xf]
  %v92 = vld [vmem:[%s1 + $0x10c] sm:$0xf]
  %v93 = vld [vmem:[%s1 + $0x110] sm:$0xf]
  %v94 = vld [vmem:[%s1 + $0x114] sm:$0xf]
  %v95 = vld [vmem:[%s1 + $0x118] sm:$0xf]
  %v96 = vld [vmem:[%s1 + $0x11c] sm:$0xf]
  %v97 = vld [vmem:[%s1 + $0x120] sm:$0xf]
  %v98 = vld [vmem:[%s1 + $0x124] sm:$0xf]
  %v99 = vld [vmem:[%s1 + $0x128] sm:$0xf]
  %v100 = vld [vmem:[%s1 + $0x12c] sm:$0xf]
  %v101 = vld [vmem:[%s1 + $0x130] sm:$0xf]
  %v102 = vld [vmem:[%s1 + $0x134] sm:$0xf]
  %v103 = vld [vmem:[%s1 + $0x138] sm:$0xf]
  %v104 = vld [vmem:[%s1 + $0x13c] sm:$0xf]
  %v108 = vunpack.c.l.b16 %v22
  %v109 = vunpack.c.h.b16 %v22
  %v110 = vunpack.c.l.b16 %v23
  %v111 = vunpack.c.h.b16 %v23
  %v112 = vunpack.c.l.b16 %v24
  %v113 = vpack.c.b16 %v108, %v108
  %v114 = vpack.c.b16 %v109, %v109
  %v115 = vpack.c.b16 %v110, %v110
  %v116 = vpack.c.b16 %v111, %v111
  %v117 = vpack.c.b16 %v112, %v112
  %v203 = vunpack.c.l.b16 %v25
  %v204 = vunpack.c.l.b16 %v26
  %v205 = vunpack.c.l.b16 %v27
  %v206 = vunpack.c.l.b16 %v28
  %v207 = vunpack.c.l.b16 %v29
  %v208 = vunpack.c.l.b16 %v30
  %v209 = vunpack.c.l.b16 %v31
  %v210 = vunpack.c.l.b16 %v32
  %v211 = vunpack.c.l.b16 %v33
  %v212 = vunpack.c.l.b16 %v34
  %v213 = vunpack.c.l.b16 %v35
  %v214 = vunpack.c.l.b16 %v36
  %v215 = vunpack.c.l.b16 %v37
  %v216 = vunpack.c.l.b16 %v38
  %v217 = vunpack.c.l.b16 %v39
  %v218 = vunpack.c.l.b16 %v40
  %v219 = vunpack.c.l.b16 %v41
  %v220 = vunpack.c.l.b16 %v42
  %v221 = vunpack.c.l.b16 %v43
  %v222 = vunpack.c.l.b16 %v44
  %v223 = vunpack.c.l.b16 %v45
  %v224 = vunpack.c.l.b16 %v46
  %v225 = vunpack.c.l.b16 %v47
  %v226 = vunpack.c.l.b16 %v48
  %v227 = vunpack.c.l.b16 %v49
  %v228 = vunpack.c.l.b16 %v50
  %v229 = vunpack.c.l.b16 %v51
  %v230 = vunpack.c.l.b16 %v52
  %v231 = vunpack.c.l.b16 %v53
  %v232 = vunpack.c.l.b16 %v54
  %v233 = vunpack.c.l.b16 %v55
  %v234 = vunpack.c.l.b16 %v56
  %v235 = vunpack.c.l.b16 %v57
  %v236 = vunpack.c.l.b16 %v58
  %v237 = vunpack.c.l.b16 %v59
  %v238 = vunpack.c.l.b16 %v60
  %v239 = vunpack.c.l.b16 %v61
  %v240 = vunpack.c.l.b16 %v62
  %v241 = vunpack.c.l.b16 %v63
  %v242 = vunpack.c.l.b16 %v64
  %v243 = vunpack.c.l.b16 %v65
  %v244 = vunpack.c.l.b16 %v66
  %v245 = vunpack.c.l.b16 %v67
  %v246 = vunpack.c.l.b16 %v68
  %v247 = vunpack.c.l.b16 %v69
  %v248 = vunpack.c.l.b16 %v70
  %v249 = vunpack.c.l.b16 %v71
  %v250 = vunpack.c.l.b16 %v72
  %v251 = vunpack.c.l.b16 %v73
  %v252 = vunpack.c.l.b16 %v74
  %v253 = vunpack.c.l.b16 %v75
  %v254 = vunpack.c.l.b16 %v76
  %v255 = vunpack.c.l.b16 %v77
  %v256 = vunpack.c.l.b16 %v78
  %v257 = vunpack.c.l.b16 %v79
  %v258 = vunpack.c.l.b16 %v80
  %v259 = vunpack.c.l.b16 %v81
  %v260 = vunpack.c.l.b16 %v82
  %v261 = vunpack.c.l.b16 %v83
  %v262 = vunpack.c.l.b16 %v84
  %v263 = vunpack.c.l.b16 %v85
  %v264 = vunpack.c.l.b16 %v86
  %v265 = vunpack.c.l.b16 %v87
  %v266 = vunpack.c.l.b16 %v88
  %v267 = vunpack.c.l.b16 %v89
  %v268 = vunpack.c.l.b16 %v90
  %v269 = vunpack.c.l.b16 %v91
  %v270 = vunpack.c.l.b16 %v92
  %v271 = vunpack.c.l.b16 %v93
  %v272 = vunpack.c.l.b16 %v94
  %v273 = vunpack.c.l.b16 %v95
  %v274 = vunpack.c.l.b16 %v96
  %v275 = vunpack.c.l.b16 %v97
  %v276 = vunpack.c.l.b16 %v98
  %v277 = vunpack.c.l.b16 %v99
  %v278 = vunpack.c.l.b16 %v100
  %v279 = vunpack.c.l.b16 %v101
  %v280 = vunpack.c.l.b16 %v102
  %v281 = vunpack.c.l.b16 %v103
  %v282 = vunpack.c.l.b16 %v104
  %v283 = vpack.c.b16 %v204, %v203
  %v284 = vpack.c.b16 %v206, %v205
  %v285 = vpack.c.b16 %v208, %v207
  %v286 = vpack.c.b16 %v210, %v209
  %v287 = vpack.c.b16 %v212, %v211
  %v288 = vpack.c.b16 %v214, %v213
  %v289 = vpack.c.b16 %v216, %v215
  %v290 = vpack.c.b16 %v218, %v217
  %v291 = vpack.c.b16 %v220, %v219
  %v292 = vpack.c.b16 %v222, %v221
  %v293 = vpack.c.b16 %v224, %v223
  %v294 = vpack.c.b16 %v226, %v225
  %v295 = vpack.c.b16 %v228, %v227
  %v296 = vpack.c.b16 %v230, %v229
  %v297 = vpack.c.b16 %v232, %v231
  %v298 = vpack.c.b16 %v234, %v233
  %v299 = vpack.c.b16 %v236, %v235
  %v300 = vpack.c.b16 %v238, %v237
  %v301 = vpack.c.b16 %v240, %v239
  %v302 = vpack.c.b16 %v242, %v241
  %v303 = vpack.c.b16 %v244, %v243
  %v304 = vpack.c.b16 %v246, %v245
  %v305 = vpack.c.b16 %v248, %v247
  %v306 = vpack.c.b16 %v250, %v249
  %v307 = vpack.c.b16 %v252, %v251
  %v308 = vpack.c.b16 %v254, %v253
  %v309 = vpack.c.b16 %v256, %v255
  %v310 = vpack.c.b16 %v258, %v257
  %v311 = vpack.c.b16 %v260, %v259
  %v312 = vpack.c.b16 %v262, %v261
  %v313 = vpack.c.b16 %v264, %v263
  %v314 = vpack.c.b16 %v266, %v265
  %v315 = vpack.c.b16 %v268, %v267
  %v316 = vpack.c.b16 %v270, %v269
  %v317 = vpack.c.b16 %v272, %v271
  %v318 = vpack.c.b16 %v274, %v273
  %v319 = vpack.c.b16 %v276, %v275
  %v320 = vpack.c.b16 %v278, %v277
  %v321 = vpack.c.b16 %v280, %v279
  %v322 = vpack.c.b16 %v282, %v281
  %363 = vmatprep.subr.bf16.mxu0 0
  %364 = vmatpush1.bf16.msra.mxu0 %v283
  %365 = vmatprep.subr.bf16.mxu0 0
  %366 = vmatpush1.bf16.msra.mxu0 %v284
  %367 = vmatprep.subr.bf16.mxu0 0
  %368 = vmatpush1.bf16.msra.mxu0 %v285
  %369 = vmatprep.subr.bf16.mxu0 0
  %370 = vmatpush1.bf16.msra.mxu0 %v286
  %371 = vmatprep.subr.bf16.mxu0 0
  %372 = vmatpush1.bf16.msra.mxu0 %v287
  %373 = vmatprep.subr.bf16.mxu0 0
  %374 = vmatpush1.bf16.msra.mxu0 %v288
  %375 = vmatprep.subr.bf16.mxu0 0
  %376 = vmatpush1.bf16.msra.mxu0 %v289
  %377 = vmatprep.subr.bf16.mxu0 0
  %378 = vmatpush1.bf16.msra.mxu0 %v290
  %379 = vmatprep.subr.bf16.mxu0 0
  %380 = vmatpush1.bf16.msra.mxu0 %v291
  %381 = vmatprep.subr.bf16.mxu0 0
  %382 = vmatpush1.bf16.msra.mxu0 %v292
  %383 = vmatprep.subr.bf16.mxu0 0
  %384 = vmatpush1.bf16.msra.mxu0 %v293
  %385 = vmatprep.subr.bf16.mxu0 0
  %386 = vmatpush1.bf16.msra.mxu0 %v294
  %387 = vmatprep.subr.bf16.mxu0 0
  %388 = vmatpush1.bf16.msra.mxu0 %v295
  %389 = vmatprep.subr.bf16.mxu0 0
  %390 = vmatpush1.bf16.msra.mxu0 %v296
  %391 = vmatprep.subr.bf16.mxu0 0
  %392 = vmatpush1.bf16.msra.mxu0 %v297
  %393 = vmatprep.subr.bf16.mxu0 0
  %394 = vmatpush1.bf16.msra.mxu0 %v298
  %395 = vmatprep.mubr.bf16.mxu0 %v114
  %396 = vmatmul.mubr.bf16.gmra.mrb[0].mxu0 %v113
  %v397 = vpop.f32.mrb[0].mxu0
  %v398 = vadd.f32 0.0, %v397
  %v399 = vpop.f32.mrb[0].mxu0
  %v400 = vpop.f32.mrb[0].mxu0
  %v401 = vpop.f32.mrb[0].mxu0
  %402 = vdwg.mxu0
  %403 = vmatprep.subr.bf16.mxu0 0
  %404 = vmatpush1.bf16.msra.mxu0 %v299
  %405 = vmatprep.subr.bf16.mxu0 0
  %406 = vmatpush1.bf16.msra.mxu0 %v300
  %407 = vmatprep.subr.bf16.mxu0 0
  %408 = vmatpush1.bf16.msra.mxu0 %v301
  %409 = vmatprep.subr.bf16.mxu0 0
  %410 = vmatpush1.bf16.msra.mxu0 %v302
  %411 = vmatprep.subr.bf16.mxu0 0
  %412 = vmatpush1.bf16.msra.mxu0 %v303
  %413 = vmatprep.subr.bf16.mxu0 0
  %414 = vmatpush1.bf16.msra.mxu0 %v304
  %415 = vmatprep.subr.bf16.mxu0 0
  %416 = vmatpush1.bf16.msra.mxu0 %v305
  %417 = vmatprep.subr.bf16.mxu0 0
  %418 = vmatpush1.bf16.msra.mxu0 %v306
  %419 = vmatprep.subr.bf16.mxu0 0
  %420 = vmatpush1.bf16.msra.mxu0 %v307
  %421 = vmatprep.subr.bf16.mxu0 0
  %422 = vmatpush1.bf16.msra.mxu0 %v308
  %423 = vmatprep.subr.bf16.mxu0 0
  %424 = vmatpush1.bf16.msra.mxu0 %v309
  %425 = vmatprep.subr.bf16.mxu0 0
  %426 = vmatpush1.bf16.msra.mxu0 %v310
  %427 = vmatprep.subr.bf16.mxu0 0
  %428 = vmatpush1.bf16.msra.mxu0 %v311
  %429 = vmatprep.subr.bf16.mxu0 0
  %430 = vmatpush1.bf16.msra.mxu0 %v312
  %431 = vmatprep.subr.bf16.mxu0 0
  %432 = vmatpush1.bf16.msra.mxu0 %v313
  %433 = vmatprep.subr.bf16.mxu0 0
  %434 = vmatpush1.bf16.msra.mxu0 %v314
  %435 = vmatprep.mubr.bf16.mxu0 %v116
  %436 = vmatmul.mubr.bf16.gmra.mrb[0].mxu0 %v115
  %v437 = vpop.f32.mrb[0].mxu0
  %v438 = vadd.f32 %v398, %v437
  %v439 = vpop.f32.mrb[0].mxu0
  %v440 = vpop.f32.mrb[0].mxu0
  %v441 = vpop.f32.mrb[0].mxu0
  %442 = vdwg.mxu0
  %443 = vmatprep.subr.bf16.mxu0 0
  %444 = vmatpush1.bf16.msra.mxu0 %v315
  %445 = vmatprep.subr.bf16.mxu0 0
  %446 = vmatpush1.bf16.msra.mxu0 %v316
  %447 = vmatprep.subr.bf16.mxu0 0
  %448 = vmatpush1.bf16.msra.mxu0 %v317
  %449 = vmatprep.subr.bf16.mxu0 0
  %450 = vmatpush1.bf16.msra.mxu0 %v318
  %451 = vmatprep.subr.bf16.mxu0 0
  %452 = vmatpush1.bf16.msra.mxu0 %v319
  %453 = vmatprep.subr.bf16.mxu0 0
  %454 = vmatpush1.bf16.msra.mxu0 %v320
  %455 = vmatprep.subr.bf16.mxu0 0
  %456 = vmatpush1.bf16.msra.mxu0 %v321
  %457 = vmatprep.subr.bf16.mxu0 0
  %458 = vmatpush1.bf16.msra.mxu0 %v322
  %459 = vmatprep.subr.bf16.mxu0 0
  %460 = vmatpush1.bf16.msra.mxu0 0
  %461 = vmatprep.subr.bf16.mxu0 0
  %462 = vmatpush1.bf16.msra.mxu0 0
  %463 = vmatprep.subr.bf16.mxu0 0
  %464 = vmatpush1.bf16.msra.mxu0 0
  %465 = vmatprep.subr.bf16.mxu0 0
  %466 = vmatpush1.bf16.msra.mxu0 0
  %467 = vmatprep.subr.bf16.mxu0 0
  %468 = vmatpush1.bf16.msra.mxu0 0
  %469 = vmatprep.subr.bf16.mxu0 0
  %470 = vmatpush1.bf16.msra.mxu0 0
  %471 = vmatprep.subr.bf16.mxu0 0
  %472 = vmatpush1.bf16.msra.mxu0 0
  %473 = vmatprep.subr.bf16.mxu0 0
  %474 = vmatpush1.bf16.msra.mxu0 0
  %475 = vmatprep.mubr.bf16.mxu0 0
  %476 = vmatmul.mubr.bf16.gmra.mrb[0].mxu0 %v117
  %v477 = vpop.f32.mrb[0].mxu0
  %v478 = vadd.f32 %v438, %v477
  %v479 = vpop.f32.mrb[0].mxu0
  %v480 = vpop.f32.mrb[0].mxu0
  %v481 = vpop.f32.mrb[0].mxu0
  %482 = vdwg.mxu0
  %v483 = vadd.f32 %v21, %v478
  %vm484 = vcmask 523264
  %485 = vst.msk [vmem:[#allocation2] sm:$0xff] %vm484, %v483
  // Predicated region
  $region18: #{dqn_forward.6} parent=0 // pred_check
    %p486 = pneg %p15
  $region19: #{dqn_forward.6} parent=0 // pred_check_branch
    %488 = sbr.rel (%p486) target = $region21
  $region20: #{dqn_forward.6} parent=0 // pred_region
    %v489 = vld [vmem:[#allocation2] sm:$0xff]
    %v490 = vld [vmem:[%s2] sm:$0x1]
    %v492 = vlaneseq
    %v493 = vshrl.u32 %v492, 7
    %v494 = vsub.s32 0, %v493
    %v495 = vrot.slane %v490, %v494
    %v497 = vadd.f32 %v489, %v495
    %v498 = vmax.f32 %v497, 0.0
    %v499 = vpack.c.bf16 %v498, %v498
    %vm500 = vcmask 519168
    %501 = vst.msk [vmem:[%s3] sm:$0xf] %vm500, %v499
  $region21: #{dqn_forward.6} parent=0 // pred_fallthru
    _
  // Predicated region
  $region22: #{dqn_forward.6} parent=0 // pred_check
    _
  $region23: #{dqn_forward.6} parent=0 // pred_check_branch
    %503 = sbr.rel (0) target = $region25
  $region24: #{dqn_forward.6} parent=0 // pred_region
    _
  $region25: #{dqn_forward.6} parent=0 // pred_fallthru
    _
  // Predicated region
  $region26: #{dqn_forward.6} parent=0 // pred_check
    _
  $region27: #{dqn_forward.6} parent=0 // pred_check_branch
    %505 = sbr.rel (0) target = $region29
  $region28: #{dqn_forward.6} parent=0 // pred_region
    _
  $region29: #{dqn_forward.6} parent=0 // pred_fallthru
    _

// kernel: dqn_forward.7
$region0: #{dqn_forward.7}
  #allocation0 [shape = 'u32[]', space=smem, size = 0x4, offset = 0x4, fixed_abs, tag = 'smem constant byte address 0x4 - core index']
  #allocation1 [shape = 'u32[144,128]{1,0:T(1,128)}', space=vmem, size = 0x12000, scoped, tag = 'internal scratch']
  #allocation2 [shape = 'f32[8,512]{1,0:T(8,128)}', space=vmem, size = 0x4000, scoped, tag = 'scratch operand']
  %s0 = inlined_call_operand.vmem [shape: bf16[8,128], index: 0, kind: input, shape index: {}]
  %s1 = inlined_call_operand.vmem [shape: bf16[128,512], index: 1, kind: input, shape index: {}]
  %s2 = inlined_call_operand.vmem [shape: f32[1,512], index: 2, kind: input, shape index: {}]
  %s3 = inlined_call_operand.vmem [shape: bf16[512,6], index: 3, kind: input, shape index: {}]
  %s4 = inlined_call_operand.vmem [shape: f32[1,6], index: 4, kind: input, shape index: {}]
  %s5 = inlined_call_operand.vmem [shape: f32[8,6], index: 5, kind: output, shape index: {}]
  %s6 = sld [smem:[#allocation0]]
  $region38: #{dqn_forward.7} parent=0
    _
  %s8 = ssub.s32 1, %s6
  %s9 = scalar_select 0, %s8, %s6
  // Predicated region
  $region2: #{dqn_forward.7} parent=0 // pred_check
    _
  $region3: #{dqn_forward.7} parent=0 // pred_check_branch
    %11 = sbr.rel (0) target = $region5
  $region4: #{dqn_forward.7} parent=0 // pred_region
    _
  $region5: #{dqn_forward.7} parent=0 // pred_fallthru
    _
  // Predicated region
  $region6: #{dqn_forward.7} parent=0 // pred_check
    _
  $region7: #{dqn_forward.7} parent=0 // pred_check_branch
    %13 = sbr.rel (0) target = $region9
  $region8: #{dqn_forward.7} parent=0 // pred_region
    _
  $region9: #{dqn_forward.7} parent=0 // pred_fallthru
    _
  // Predicated region
  $region10: #{dqn_forward.7} parent=0 // pred_check
    _
  $region11: #{dqn_forward.7} parent=0 // pred_check_branch
    %15 = sbr.rel (0) target = $region13
  $region12: #{dqn_forward.7} parent=0 // pred_region
    _
  $region13: #{dqn_forward.7} parent=0 // pred_fallthru
    _
  // Predicated region
  $region14: #{dqn_forward.7} parent=0 // pred_check
    _
  $region15: #{dqn_forward.7} parent=0 // pred_check_branch
    %17 = sbr.rel (0) target = $region17
  $region16: #{dqn_forward.7} parent=0 // pred_region
    _
  $region17: #{dqn_forward.7} parent=0 // pred_fallthru
    _
  // Predicated region
  $region18: #{dqn_forward.7} parent=0 // pred_check
    _
  $region19: #{dqn_forward.7} parent=0 // pred_check_branch
    %19 = sbr.rel (0) target = $region21
  $region20: #{dqn_forward.7} parent=0 // pred_region
    _
  $region21: #{dqn_forward.7} parent=0 // pred_fallthru
    _
  %p21 = scmp.eq.s32.totalorder 0, 0
  // Predicated region
  $region22: #{dqn_forward.7} parent=0 // pred_check
    %p22 = pneg %p21
  $region23: #{dqn_forward.7} parent=0 // pred_check_branch
    %24 = sbr.rel (%p22) target = $region25
  $region24: #{dqn_forward.7} parent=0 // pred_region
    %25 = vst [vmem:[#allocation2] sm:$0xff] 0.0
    %26 = vst [vmem:[#allocation2 + $0x8] sm:$0xff] 0.0
    %27 = vst [vmem:[#allocation2 + $0x10] sm:$0xff] 0.0
    %28 = vst [vmem:[#allocation2 + $0x18] sm:$0xff] 0.0
  $region25: #{dqn_forward.7} parent=0 // pred_fallthru
    _
  %v29 = vld [vmem:[#allocation2] sm:$0xff]
  %v30 = vld [vmem:[#allocation2 + $0x8] sm:$0xff]
  %v31 = vld [vmem:[#allocation2 + $0x10] sm:$0xff]
  %v32 = vld [vmem:[#allocation2 + $0x18] sm:$0xff]
  %v33 = vld [vmem:[%s0] sm:$0xf]
  %v34 = vld [vmem:[%s1] sm:$0xff]
  %v35 = vld [vmem:[%s1 + $0x8] sm:$0xff]
  %v36 = vld [vmem:[%s1 + $0x10] sm:$0xff]
  %v37 = vld [vmem:[%s1 + $0x18] sm:$0xff]
  %v38 = vld [vmem:[%s1 + $0x20] sm:$0xff]
  %v39 = vld [vmem:[%s1 + $0x28] sm:$0xff]
  %v40 = vld [vmem:[%s1 + $0x30] sm:$0xff]
  %v41 = vld [vmem:[%s1 + $0x38] sm:$0xff]
  %v42 = vld [vmem:[%s1 + $0x40] sm:$0xff]
  %v43 = vld [vmem:[%s1 + $0x48] sm:$0xff]
  %v44 = vld [vmem:[%s1 + $0x50] sm:$0xff]
  %v45 = vld [vmem:[%s1 + $0x58] sm:$0xff]
  %v46 = vld [vmem:[%s1 + $0x60] sm:$0xff]
  %v47 = vld [vmem:[%s1 + $0x68] sm:$0xff]
  %v48 = vld [vmem:[%s1 + $0x70] sm:$0xff]
  %v49 = vld [vmem:[%s1 + $0x78] sm:$0xff]
  %v50 = vld [vmem:[%s1 + $0x80] sm:$0xff]
  %v51 = vld [vmem:[%s1 + $0x88] sm:$0xff]
  %v52 = vld [vmem:[%s1 + $0x90] sm:$0xff]
  %v53 = vld [vmem:[%s1 + $0x98] sm:$0xff]
  %v54 = vld [vmem:[%s1 + $0xa0] sm:$0xff]
  %v55 = vld [vmem:[%s1 + $0xa8] sm:$0xff]
  %v56 = vld [vmem:[%s1 + $0xb0] sm:$0xff]
  %v57 = vld [vmem:[%s1 + $0xb8] sm:$0xff]
  %v58 = vld [vmem:[%s1 + $0xc0] sm:$0xff]
  %v59 = vld [vmem:[%s1 + $0xc8] sm:$0xff]
  %v60 = vld [vmem:[%s1 + $0xd0] sm:$0xff]
  %v61 = vld [vmem:[%s1 + $0xd8] sm:$0xff]
  %v62 = vld [vmem:[%s1 + $0xe0] sm:$0xff]
  %v63 = vld [vmem:[%s1 + $0xe8] sm:$0xff]
  %v64 = vld [vmem:[%s1 + $0xf0] sm:$0xff]
  %v65 = vld [vmem:[%s1 + $0xf8] sm:$0xff]
  %v98 = vunpack.c.l.b16 %v34
  %v99 = vunpack.c.h.b16 %v34
  %v100 = vunpack.c.l.b16 %v35
  %v101 = vunpack.c.h.b16 %v35
  %v102 = vunpack.c.l.b16 %v36
  %v103 = vunpack.c.h.b16 %v36
  %v104 = vunpack.c.l.b16 %v37
  %v105 = vunpack.c.h.b16 %v37
  %v106 = vunpack.c.l.b16 %v38
  %v107 = vunpack.c.h.b16 %v38
  %v108 = vunpack.c.l.b16 %v39
  %v109 = vunpack.c.h.b16 %v39
  %v110 = vunpack.c.l.b16 %v40
  %v111 = vunpack.c.h.b16 %v40
  %v112 = vunpack.c.l.b16 %v41
  %v113 = vunpack.c.h.b16 %v41
  %v114 = vunpack.c.l.b16 %v42
  %v115 = vunpack.c.h.b16 %v42
  %v116 = vunpack.c.l.b16 %v43
  %v117 = vunpack.c.h.b16 %v43
  %v118 = vunpack.c.l.b16 %v44
  %v119 = vunpack.c.h.b16 %v44
  %v120 = vunpack.c.l.b16 %v45
  %v121 = vunpack.c.h.b16 %v45
  %v122 = vunpack.c.l.b16 %v46
  %v123 = vunpack.c.h.b16 %v46
  %v124 = vunpack.c.l.b16 %v47
  %v125 = vunpack.c.h.b16 %v47
  %v126 = vunpack.c.l.b16 %v48
  %v127 = vunpack.c.h.b16 %v48
  %v128 = vunpack.c.l.b16 %v49
  %v129 = vunpack.c.h.b16 %v49
  %v130 = vunpack.c.l.b16 %v50
  %v131 = vunpack.c.h.b16 %v50
  %v132 = vunpack.c.l.b16 %v51
  %v133 = vunpack.c.h.b16 %v51
  %v134 = vunpack.c.l.b16 %v52
  %v135 = vunpack.c.h.b16 %v52
  %v136 = vunpack.c.l.b16 %v53
  %v137 = vunpack.c.h.b16 %v53
  %v138 = vunpack.c.l.b16 %v54
  %v139 = vunpack.c.h.b16 %v54
  %v140 = vunpack.c.l.b16 %v55
  %v141 = vunpack.c.h.b16 %v55
  %v142 = vunpack.c.l.b16 %v56
  %v143 = vunpack.c.h.b16 %v56
  %v144 = vunpack.c.l.b16 %v57
  %v145 = vunpack.c.h.b16 %v57
  %v146 = vunpack.c.l.b16 %v58
  %v147 = vunpack.c.h.b16 %v58
  %v148 = vunpack.c.l.b16 %v59
  %v149 = vunpack.c.h.b16 %v59
  %v150 = vunpack.c.l.b16 %v60
  %v151 = vunpack.c.h.b16 %v60
  %v152 = vunpack.c.l.b16 %v61
  %v153 = vunpack.c.h.b16 %v61
  %v154 = vunpack.c.l.b16 %v62
  %v155 = vunpack.c.h.b16 %v62
  %v156 = vunpack.c.l.b16 %v63
  %v157 = vunpack.c.h.b16 %v63
  %v158 = vunpack.c.l.b16 %v64
  %v159 = vunpack.c.h.b16 %v64
  %v160 = vunpack.c.l.b16 %v65
  %v161 = vunpack.c.h.b16 %v65
  %v162 = vpack.c.b16 %v102, %v98
  %v163 = vpack.c.b16 %v103, %v99
  %v164 = vpack.c.b16 %v104, %v100
  %v165 = vpack.c.b16 %v105, %v101
  %v166 = vpack.c.b16 %v110, %v106
  %v167 = vpack.c.b16 %v111, %v107
  %v168 = vpack.c.b16 %v112, %v108
  %v169 = vpack.c.b16 %v113, %v109
  %v170 = vpack.c.b16 %v118, %v114
  %v171 = vpack.c.b16 %v119, %v115
  %v172 = vpack.c.b16 %v120, %v116
  %v173 = vpack.c.b16 %v121, %v117
  %v174 = vpack.c.b16 %v126, %v122
  %v175 = vpack.c.b16 %v127, %v123
  %v176 = vpack.c.b16 %v128, %v124
  %v177 = vpack.c.b16 %v129, %v125
  %v178 = vpack.c.b16 %v134, %v130
  %v179 = vpack.c.b16 %v135, %v131
  %v180 = vpack.c.b16 %v136, %v132
  %v181 = vpack.c.b16 %v137, %v133
  %v182 = vpack.c.b16 %v142, %v138
  %v183 = vpack.c.b16 %v143, %v139
  %v184 = vpack.c.b16 %v144, %v140
  %v185 = vpack.c.b16 %v145, %v141
  %v186 = vpack.c.b16 %v150, %v146
  %v187 = vpack.c.b16 %v151, %v147
  %v188 = vpack.c.b16 %v152, %v148
  %v189 = vpack.c.b16 %v153, %v149
  %v190 = vpack.c.b16 %v158, %v154
  %v191 = vpack.c.b16 %v159, %v155
  %v192 = vpack.c.b16 %v160, %v156
  %v193 = vpack.c.b16 %v161, %v157
  %226 = vmatprep.subr.bf16.mxu0 %v163
  %227 = vmatpush1.bf16.msra.mxu0 %v162
  %228 = vmatprep.subr.bf16.mxu0 %v167
  %229 = vmatpush1.bf16.msra.mxu0 %v166
  %230 = vmatprep.subr.bf16.mxu0 %v171
  %231 = vmatpush1.bf16.msra.mxu0 %v170
  %232 = vmatprep.subr.bf16.mxu0 %v175
  %233 = vmatpush1.bf16.msra.mxu0 %v174
  %234 = vmatprep.subr.bf16.mxu0 %v179
  %235 = vmatpush1.bf16.msra.mxu0 %v178
  %236 = vmatprep.subr.bf16.mxu0 %v183
  %237 = vmatpush1.bf16.msra.mxu0 %v182
  %238 = vmatprep.subr.bf16.mxu0 %v187
  %239 = vmatpush1.bf16.msra.mxu0 %v186
  %240 = vmatprep.subr.bf16.mxu0 %v191
  %241 = vmatpush1.bf16.msra.mxu0 %v190
  %242 = vmatprep.subr.bf16.mxu0 0
  %243 = vmatpush1.bf16.msra.mxu0 0
  %244 = vmatprep.subr.bf16.mxu0 0
  %245 = vmatpush1.bf16.msra.mxu0 0
  %246 = vmatprep.subr.bf16.mxu0 0
  %247 = vmatpush1.bf16.msra.mxu0 0
  %248 = vmatprep.subr.bf16.mxu0 0
  %249 = vmatpush1.bf16.msra.mxu0 0
  %250 = vmatprep.subr.bf16.mxu0 0
  %251 = vmatpush1.bf16.msra.mxu0 0
  %252 = vmatprep.subr.bf16.mxu0 0
  %253 = vmatpush1.bf16.msra.mxu0 0
  %254 = vmatprep.subr.bf16.mxu0 0
  %255 = vmatpush1.bf16.msra.mxu0 0
  %256 = vmatprep.subr.bf16.mxu0 0
  %257 = vmatpush1.bf16.msra.mxu0 0
  %258 = vmatprep.mubr.bf16.mxu0 0
  %259 = vmatmul.mubr.bf16.gmra.mrb[0].mxu0 %v33
  %v260 = vpop.f32.mrb[0].mxu0
  %v261 = vadd.f32 0.0, %v260
  %v262 = vpop.f32.mrb[0].mxu0
  %v263 = vadd.f32 0.0, %v262
  %v264 = vpop.f32.mrb[0].mxu0
  %v265 = vpop.f32.mrb[0].mxu0
  %266 = vdwg.mxu0
  %267 = vmatprep.subr.bf16.mxu0 %v165
  %268 = vmatpush1.bf16.msra.mxu0 %v164
  %269 = vmatprep.subr.bf16.mxu0 %v169
  %270 = vmatpush1.bf16.msra.mxu0 %v168
  %271 = vmatprep.subr.bf16.mxu0 %v173
  %272 = vmatpush1.bf16.msra.mxu0 %v172
  %273 = vmatprep.subr.bf16.mxu0 %v177
  %274 = vmatpush1.bf16.msra.mxu0 %v176
  %275 = vmatprep.subr.bf16.mxu0 %v181
  %276 = vmatpush1.bf16.msra.mxu0 %v180
  %277 = vmatprep.subr.bf16.mxu0 %v185
  %278 = vmatpush1.bf16.msra.mxu0 %v184
  %279 = vmatprep.subr.bf16.mxu0 %v189
  %280 = vmatpush1.bf16.msra.mxu0 %v188
  %281 = vmatprep.subr.bf16.mxu0 %v193
  %282 = vmatpush1.bf16.msra.mxu0 %v192
  %283 = vmatprep.subr.bf16.mxu0 0
  %284 = vmatpush1.bf16.msra.mxu0 0
  %285 = vmatprep.subr.bf16.mxu0 0
  %286 = vmatpush1.bf16.msra.mxu0 0
  %287 = vmatprep.subr.bf16.mxu0 0
  %288 = vmatpush1.bf16.msra.mxu0 0
  %289 = vmatprep.subr.bf16.mxu0 0
  %290 = vmatpush1.bf16.msra.mxu0 0
  %291 = vmatprep.subr.bf16.mxu0 0
  %292 = vmatpush1.bf16.msra.mxu0 0
  %293 = vmatprep.subr.bf16.mxu0 0
  %294 = vmatpush1.bf16.msra.mxu0 0
  %295 = vmatprep.subr.bf16.mxu0 0
  %296 = vmatpush1.bf16.msra.mxu0 0
  %297 = vmatprep.subr.bf16.mxu0 0
  %298 = vmatpush1.bf16.msra.mxu0 0
  %299 = vmatprep.mubr.bf16.mxu0 0
  %300 = vmatmul.mubr.bf16.gmra.mrb[0].mxu0 %v33
  %v301 = vpop.f32.mrb[0].mxu0
  %v302 = vadd.f32 0.0, %v301
  %v303 = vpop.f32.mrb[0].mxu0
  %v304 = vadd.f32 0.0, %v303
  %v305 = vpop.f32.mrb[0].mxu0
  %v306 = vpop.f32.mrb[0].mxu0
  %307 = vdwg.mxu0
  %v308 = vadd.f32 %v29, %v261
  %v309 = vadd.f32 %v30, %v263
  %v310 = vadd.f32 %v31, %v302
  %v311 = vadd.f32 %v32, %v304
  %312 = vst [vmem:[#allocation2] sm:$0xff] %v308
  %313 = vst [vmem:[#allocation2 + $0x8] sm:$0xff] %v309
  %314 = vst [vmem:[#allocation2 + $0x10] sm:$0xff] %v310
  %315 = vst [vmem:[#allocation2 + $0x18] sm:$0xff] %v311
  // Predicated region
  $region26: #{dqn_forward.7} parent=0 // pred_check
    %p316 = pneg %p21
  $region27: #{dqn_forward.7} parent=0 // pred_check_branch
    %318 = sbr.rel (%p316) target = $region29
  $region28: #{dqn_forward.7} parent=0 // pred_region
    %v319 = vld [vmem:[#allocation2] sm:$0xff]
    %v320 = vld [vmem:[#allocation2 + $0x8] sm:$0xff]
    %v321 = vld [vmem:[#allocation2 + $0x10] sm:$0xff]
    %v322 = vld [vmem:[#allocation2 + $0x18] sm:$0xff]
    %v323 = vld [vmem:[%s2] sm:$0xf]
    %v325 = vlaneseq
    %v326 = vshrl.u32 %v325, 7
    %v327 = vsub.s32 0, %v326
    %v328 = vrot.slane %v323, %v327
    %v329 = vlaneseq
    %v330 = vshrl.u32 %v329, 7
    %v331 = vsub.s32 1, %v330
    %v332 = vrot.slane %v323, %v331
    %v333 = vlaneseq
    %v334 = vshrl.u32 %v333, 7
    %v335 = vsub.s32 2, %v334
    %v336 = vrot.slane %v323, %v335
    %v337 = vlaneseq
    %v338 = vshrl.u32 %v337, 7
    %v339 = vsub.s32 3, %v338
    %v340 = vrot.slane %v323, %v339
    %v345 = vadd.f32 %v319, %v328
    %v346 = vadd.f32 %v320, %v332
    %v347 = vadd.f32 %v321, %v336
    %v348 = vadd.f32 %v322, %v340
    %v349 = vmax.f32 %v345, 0.0
    %v350 = vmax.f32 %v346, 0.0
    %v351 = vmax.f32 %v347, 0.0
    %v352 = vmax.f32 %v348, 0.0
    %v353 = vpack.c.bf16 %v349, %v349
    %v354 = vpack.c.bf16 %v350, %v350
    %v355 = vpack.c.bf16 %v351, %v351
    %v356 = vpack.c.bf16 %v352, %v352
    %v357 = vld [vmem:[%s3] sm:$0xf]
    %v358 = vld [vmem:[%s3 + $0x4] sm:$0xf]
    %v359 = vld [vmem:[%s3 + $0x8] sm:$0xf]
    %v360 = vld [vmem:[%s3 + $0xc] sm:$0xf]
    %v361 = vld [vmem:[%s3 + $0x10] sm:$0xf]
    %v362 = vld [vmem:[%s3 + $0x14] sm:$0xf]
    %v363 = vld [vmem:[%s3 + $0x18] sm:$0xf]
    %v364 = vld [vmem:[%s3 + $0x1c] sm:$0xf]
    %v365 = vld [vmem:[%s3 + $0x20] sm:$0xf]
    %v366 = vld [vmem:[%s3 + $0x24] sm:$0xf]
    %v367 = vld [vmem:[%s3 + $0x28] sm:$0xf]
    %v368 = vld [vmem:[%s3 + $0x2c] sm:$0xf]
    %v369 = vld [vmem:[%s3 + $0x30] sm:$0xf]
    %v370 = vld [vmem:[%s3 + $0x34] sm:$0xf]
    %v371 = vld [vmem:[%s3 + $0x38] sm:$0xf]
    %v372 = vld [vmem:[%s3 + $0x3c] sm:$0xf]
    %v373 = vld [vmem:[%s3 + $0x40] sm:$0xf]
    %v374 = vld [vmem:[%s3 + $0x44] sm:$0xf]
    %v375 = vld [vmem:[%s3 + $0x48] sm:$0xf]
    %v376 = vld [vmem:[%s3 + $0x4c] sm:$0xf]
    %v377 = vld [vmem:[%s3 + $0x50] sm:$0xf]
    %v378 = vld [vmem:[%s3 + $0x54] sm:$0xf]
    %v379 = vld [vmem:[%s3 + $0x58] sm:$0xf]
    %v380 = vld [vmem:[%s3 + $0x5c] sm:$0xf]
    %v381 = vld [vmem:[%s3 + $0x60] sm:$0xf]
    %v382 = vld [vmem:[%s3 + $0x64] sm:$0xf]
    %v383 = vld [vmem:[%s3 + $0x68] sm:$0xf]
    %v384 = vld [vmem:[%s3 + $0x6c] sm:$0xf]
    %v385 = vld [vmem:[%s3 + $0x70] sm:$0xf]
    %v386 = vld [vmem:[%s3 + $0x74] sm:$0xf]
    %v387 = vld [vmem:[%s3 + $0x78] sm:$0xf]
    %v388 = vld [vmem:[%s3 + $0x7c] sm:$0xf]
    %v389 = vld [vmem:[%s3 + $0x80] sm:$0xf]
    %v390 = vld [vmem:[%s3 + $0x84] sm:$0xf]
    %v391 = vld [vmem:[%s3 + $0x88] sm:$0xf]
    %v392 = vld [vmem:[%s3 + $0x8c] sm:$0xf]
    %v393 = vld [vmem:[%s3 + $0x90] sm:$0xf]
    %v394 = vld [vmem:[%s3 + $0x94] sm:$0xf]
    %v395 = vld [vmem:[%s3 + $0x98] sm:$0xf]
    %v396 = vld [vmem:[%s3 + $0x9c] sm:$0xf]
    %v397 = vld [vmem:[%s3 + $0xa0] sm:$0xf]
    %v398 = vld [vmem:[%s3 + $0xa4] sm:$0xf]
    %v399 = vld [vmem:[%s3 + $0xa8] sm:$0xf]
    %v400 = vld [vmem:[%s3 + $0xac] sm:$0xf]
    %v401 = vld [vmem:[%s3 + $0xb0] sm:$0xf]
    %v402 = vld [vmem:[%s3 + $0xb4] sm:$0xf]
    %v403 = vld [vmem:[%s3 + $0xb8] sm:$0xf]
    %v404 = vld [vmem:[%s3 + $0xbc] sm:$0xf]
    %v405 = vld [vmem:[%s3 + $0xc0] sm:$0xf]
    %v406 = vld [vmem:[%s3 + $0xc4] sm:$0xf]
    %v407 = vld [vmem:[%s3 + $0xc8] sm:$0xf]
    %v408 = vld [vmem:[%s3 + $0xcc] sm:$0xf]
    %v409 = vld [vmem:[%s3 + $0xd0] sm:$0xf]
    %v410 = vld [vmem:[%s3 + $0xd4] sm:$0xf]
    %v411 = vld [vmem:[%s3 + $0xd8] sm:$0xf]
    %v412 = vld [vmem:[%s3 + $0xdc] sm:$0xf]
    %v413 = vld [vmem:[%s3 + $0xe0] sm:$0xf]
    %v414 = vld [vmem:[%s3 + $0xe4] sm:$0xf]
    %v415 = vld [vmem:[%s3 + $0xe8] sm:$0xf]
    %v416 = vld [vmem:[%s3 + $0xec] sm:$0xf]
    %v417 = vld [vmem:[%s3 + $0xf0] sm:$0xf]
    %v418 = vld [vmem:[%s3 + $0xf4] sm:$0xf]
    %v419 = vld [vmem:[%s3 + $0xf8] sm:$0xf]
    %v420 = vld [vmem:[%s3 + $0xfc] sm:$0xf]
    %v421 = vld [vmem:[%s4] sm:$0x1]
    %v423 = vlaneseq
    %v424 = vshrl.u32 %v423, 7
    %v425 = vsub.s32 0, %v424
    %v426 = vrot.slane %v421, %v425
    %v492 = vunpack.c.l.b16 %v357
    %v493 = vunpack.c.l.b16 %v358
    %v494 = vunpack.c.l.b16 %v359
    %v495 = vunpack.c.l.b16 %v360
    %v496 = vunpack.c.l.b16 %v361
    %v497 = vunpack.c.l.b16 %v362
    %v498 = vunpack.c.l.b16 %v363
    %v499 = vunpack.c.l.b16 %v364
    %v500 = vunpack.c.l.b16 %v365
    %v501 = vunpack.c.l.b16 %v366
    %v502 = vunpack.c.l.b16 %v367
    %v503 = vunpack.c.l.b16 %v368
    %v504 = vunpack.c.l.b16 %v369
    %v505 = vunpack.c.l.b16 %v370
    %v506 = vunpack.c.l.b16 %v371
    %v507 = vunpack.c.l.b16 %v372
    %v508 = vunpack.c.l.b16 %v373
    %v509 = vunpack.c.l.b16 %v374
    %v510 = vunpack.c.l.b16 %v375
    %v511 = vunpack.c.l.b16 %v376
    %v512 = vunpack.c.l.b16 %v377
    %v513 = vunpack.c.l.b16 %v378
    %v514 = vunpack.c.l.b16 %v379
    %v515 = vunpack.c.l.b16 %v380
    %v516 = vunpack.c.l.b16 %v381
    %v517 = vunpack.c.l.b16 %v382
    %v518 = vunpack.c.l.b16 %v383
    %v519 = vunpack.c.l.b16 %v384
    %v520 = vunpack.c.l.b16 %v385
    %v521 = vunpack.c.l.b16 %v386
    %v522 = vunpack.c.l.b16 %v387
    %v523 = vunpack.c.l.b16 %v388
    %v524 = vunpack.c.l.b16 %v389
    %v525 = vunpack.c.l.b16 %v390
    %v526 = vunpack.c.l.b16 %v391
    %v527 = vunpack.c.l.b16 %v392
    %v528 = vunpack.c.l.b16 %v393
    %v529 = vunpack.c.l.b16 %v394
    %v530 = vunpack.c.l.b16 %v395
    %v531 = vunpack.c.l.b16 %v396
    %v532 = vunpack.c.l.b16 %v397
    %v533 = vunpack.c.l.b16 %v398
    %v534 = vunpack.c.l.b16 %v399
    %v535 = vunpack.c.l.b16 %v400
    %v536 = vunpack.c.l.b16 %v401
    %v537 = vunpack.c.l.b16 %v402
    %v538 = vunpack.c.l.b16 %v403
    %v539 = vunpack.c.l.b16 %v404
    %v540 = vunpack.c.l.b16 %v405
    %v541 = vunpack.c.l.b16 %v406
    %v542 = vunpack.c.l.b16 %v407
    %v543 = vunpack.c.l.b16 %v408
    %v544 = vunpack.c.l.b16 %v409
    %v545 = vunpack.c.l.b16 %v410
    %v546 = vunpack.c.l.b16 %v411
    %v547 = vunpack.c.l.b16 %v412
    %v548 = vunpack.c.l.b16 %v413
    %v549 = vunpack.c.l.b16 %v414
    %v550 = vunpack.c.l.b16 %v415
    %v551 = vunpack.c.l.b16 %v416
    %v552 = vunpack.c.l.b16 %v417
    %v553 = vunpack.c.l.b16 %v418
    %v554 = vunpack.c.l.b16 %v419
    %v555 = vunpack.c.l.b16 %v420
    %v556 = vpack.c.b16 %v493, %v492
    %v557 = vpack.c.b16 %v495, %v494
    %v558 = vpack.c.b16 %v497, %v496
    %v559 = vpack.c.b16 %v499, %v498
    %v560 = vpack.c.b16 %v501, %v500
    %v561 = vpack.c.b16 %v503, %v502
    %v562 = vpack.c.b16 %v505, %v504
    %v563 = vpack.c.b16 %v507, %v506
    %v564 = vpack.c.b16 %v509, %v508
    %v565 = vpack.c.b16 %v511, %v510
    %v566 = vpack.c.b16 %v513, %v512
    %v567 = vpack.c.b16 %v515, %v514
    %v568 = vpack.c.b16 %v517, %v516
    %v569 = vpack.c.b16 %v519, %v518
    %v570 = vpack.c.b16 %v521, %v520
    %v571 = vpack.c.b16 %v523, %v522
    %v572 = vpack.c.b16 %v525, %v524
    %v573 = vpack.c.b16 %v527, %v526
    %v574 = vpack.c.b16 %v529, %v528
    %v575 = vpack.c.b16 %v531, %v530
    %v576 = vpack.c.b16 %v533, %v532
    %v577 = vpack.c.b16 %v535, %v534
    %v578 = vpack.c.b16 %v537, %v536
    %v579 = vpack.c.b16 %v539, %v538
    %v580 = vpack.c.b16 %v541, %v540
    %v581 = vpack.c.b16 %v543, %v542
    %v582 = vpack.c.b16 %v545, %v544
    %v583 = vpack.c.b16 %v547, %v546
    %v584 = vpack.c.b16 %v549, %v548
    %v585 = vpack.c.b16 %v551, %v550
    %v586 = vpack.c.b16 %v553, %v552
    %v587 = vpack.c.b16 %v555, %v554
    %620 = vmatprep.subr.bf16.mxu0 0
    %621 = vmatpush1.bf16.msra.mxu0 %v556
    %622 = vmatprep.subr.bf16.mxu0 0
    %623 = vmatpush1.bf16.msra.mxu0 %v557
    %624 = vmatprep.subr.bf16.mxu0 0
    %625 = vmatpush1.bf16.msra.mxu0 %v558
    %626 = vmatprep.subr.bf16.mxu0 0
    %627 = vmatpush1.bf16.msra.mxu0 %v559
    %628 = vmatprep.subr.bf16.mxu0 0
    %629 = vmatpush1.bf16.msra.mxu0 %v560
    %630 = vmatprep.subr.bf16.mxu0 0
    %631 = vmatpush1.bf16.msra.mxu0 %v561
    %632 = vmatprep.subr.bf16.mxu0 0
    %633 = vmatpush1.bf16.msra.mxu0 %v562
    %634 = vmatprep.subr.bf16.mxu0 0
    %635 = vmatpush1.bf16.msra.mxu0 %v563
    %636 = vmatprep.subr.bf16.mxu0 0
    %637 = vmatpush1.bf16.msra.mxu0 %v564
    %638 = vmatprep.subr.bf16.mxu0 0
    %639 = vmatpush1.bf16.msra.mxu0 %v565
    %640 = vmatprep.subr.bf16.mxu0 0
    %641 = vmatpush1.bf16.msra.mxu0 %v566
    %642 = vmatprep.subr.bf16.mxu0 0
    %643 = vmatpush1.bf16.msra.mxu0 %v567
    %644 = vmatprep.subr.bf16.mxu0 0
    %645 = vmatpush1.bf16.msra.mxu0 %v568
    %646 = vmatprep.subr.bf16.mxu0 0
    %647 = vmatpush1.bf16.msra.mxu0 %v569
    %648 = vmatprep.subr.bf16.mxu0 0
    %649 = vmatpush1.bf16.msra.mxu0 %v570
    %650 = vmatprep.subr.bf16.mxu0 0
    %651 = vmatpush1.bf16.msra.mxu0 %v571
    %652 = vmatprep.mubr.bf16.mxu0 %v354
    %653 = vmatmul.mubr.bf16.gmra.mrb[0].mxu0 %v353
    %v654 = vpop.f32.mrb[0].mxu0
    %v655 = vadd.f32 %v426, %v654
    %v656 = vpop.f32.mrb[0].mxu0
    %v657 = vpop.f32.mrb[0].mxu0
    %v658 = vpop.f32.mrb[0].mxu0
    %659 = vdwg.mxu0
    %660 = vmatprep.subr.bf16.mxu0 0
    %661 = vmatpush1.bf16.msra.mxu0 %v572
    %662 = vmatprep.subr.bf16.mxu0 0
    %663 = vmatpush1.bf16.msra.mxu0 %v573
    %664 = vmatprep.subr.bf16.mxu0 0
    %665 = vmatpush1.bf16.msra.mxu0 %v574
    %666 = vmatprep.subr.bf16.mxu0 0
    %667 = vmatpush1.bf16.msra.mxu0 %v575
    %668 = vmatprep.subr.bf16.mxu0 0
    %669 = vmatpush1.bf16.msra.mxu0 %v576
    %670 = vmatprep.subr.bf16.mxu0 0
    %671 = vmatpush1.bf16.msra.mxu0 %v577
    %672 = vmatprep.subr.bf16.mxu0 0
    %673 = vmatpush1.bf16.msra.mxu0 %v578
    %674 = vmatprep.subr.bf16.mxu0 0
    %675 = vmatpush1.bf16.msra.mxu0 %v579
    %676 = vmatprep.subr.bf16.mxu0 0
    %677 = vmatpush1.bf16.msra.mxu0 %v580
    %678 = vmatprep.subr.bf16.mxu0 0
    %679 = vmatpush1.bf16.msra.mxu0 %v581
    %680 = vmatprep.subr.bf16.mxu0 0
    %681 = vmatpush1.bf16.msra.mxu0 %v582
    %682 = vmatprep.subr.bf16.mxu0 0
    %683 = vmatpush1.bf16.msra.mxu0 %v583
    %684 = vmatprep.subr.bf16.mxu0 0
    %685 = vmatpush1.bf16.msra.mxu0 %v584
    %686 = vmatprep.subr.bf16.mxu0 0
    %687 = vmatpush1.bf16.msra.mxu0 %v585
    %688 = vmatprep.subr.bf16.mxu0 0
    %689 = vmatpush1.bf16.msra.mxu0 %v586
    %690 = vmatprep.subr.bf16.mxu0 0
    %691 = vmatpush1.bf16.msra.mxu0 %v587
    %692 = vmatprep.mubr.bf16.mxu0 %v356
    %693 = vmatmul.mubr.bf16.gmra.mrb[0].mxu0 %v355
    %v694 = vpop.f32.mrb[0].mxu0
    %v695 = vadd.f32 %v655, %v694
    %v696 = vpop.f32.mrb[0].mxu0
    %v697 = vpop.f32.mrb[0].mxu0
    %v698 = vpop.f32.mrb[0].mxu0
    %699 = vdwg.mxu0
    %vm700 = vcmask 48128
    %701 = vst.msk [vmem:[%s5] sm:$0xff] %vm700, %v695
  $region29: #{dqn_forward.7} parent=0 // pred_fallthru
    _
  // Predicated region
  $region30: #{dqn_forward.7} parent=0 // pred_check
    _
  $region31: #{dqn_forward.7} parent=0 // pred_check_branch
    %703 = sbr.rel (0) target = $region33
  $region32: #{dqn_forward.7} parent=0 // pred_region
    _
  $region33: #{dqn_forward.7} parent=0 // pred_fallthru
    _
  // Predicated region
  $region34: #{dqn_forward.7} parent=0 // pred_check
    _
  $region35: #{dqn_forward.7} parent=0 // pred_check_branch
    %705 = sbr.rel (0) target = $region37
  $region36: #{dqn_forward.7} parent=0 // pred_region
    _
  $region37: #{dqn_forward.7} parent=0 // pred_fallthru
    _

</llo_original>
